<compile_context>
chip_gen: v6e
topology: v6e:2x2x1
jax: 0.10.0
libtpu: 0.0.40
codegen_flags: <defaults>
</compile_context>

<pallas_src>
import functools

import jax
import jax.numpy as jnp
from jax.experimental import pallas as pl
from jax.experimental.pallas import tpu as pltpu


def _round_up(x, m):
    return (x + m - 1) // m * m


# 56 MiB scoped VMEM is safe on v7x (64 MiB physical) and well above the 16/32 MiB
# defaults on v5e/v6e; on v5e/v6e (128 MiB physical) it can be raised to ~100 MiB
# for roughly 2x larger time chunks.
_VMEM_LIMIT_BYTES = 56 * 1024 * 1024
_VMEM_BUDGET_BYTES = 44 * 1024 * 1024


def _pick_time_chunk(T, Bb, E, H, budget_bytes=_VMEM_BUDGET_BYTES, cap=128):
    """Largest time chunk whose per-grid-step VMEM working set fits the budget."""
    fixed = (E * 4 * H * 2          # W_ih^T bf16 (single-buffered)
             + H * 4 * H * 2        # W_hh^T bf16 (single-buffered)
             + 4 * H * 4            # bias f32
             + 8 * Bb * H * 4)      # h0/c0 inputs + hN/cN outputs (generous)
    per_tc = (2 * Bb * E * 2        # emb chunk bf16, double-buffered
              + 2 * Bb * H * 2      # hs chunk bf16, double-buffered
              + Bb * 4 * H * 4)     # pre-gates f32 VMEM scratch
    tc = max(1, (budget_bytes - fixed) // per_tc)
    return int(max(1, min(tc, T, cap)))


def _lstm_chunk_kernel(emb_ref, h0_ref, c0_ref, wih_ref, whh_ref, bias_ref,
                       hs_ref, hN_ref, cN_ref, gates_scr, *, seq_len, padded_len):
    """One grid step == one batch block x one chunk of Tc timesteps.

    emb_ref  : (Tc, Bb, E) bf16   embedded tokens for this chunk
    h0_ref, c0_ref : (Bb, H) f32  initial state (read at chunk 0 only)
    wih_ref  : (E, 4H) bf16       W_ih^T (resident, single-buffered)
    whh_ref  : (H, 4H) bf16       W_hh^T (resident, single-buffered)
    bias_ref : (1, 4H) f32        b_ih + b_hh
    hs_ref   : (Tc, Bb, H) bf16   per-step hidden states (FC applied in glue)
    hN_ref, cN_ref : (Bb, H) f32  grid-resident carries (constant-index outputs)
    gates_scr: (Tc, Bb, 4H) f32   VMEM scratch for the fused input projection
    """
    chunk = pl.program_id(1)                       # time-chunk axis (sequential)
    tc, bb, hidden = hs_ref.shape
    needs_tail_mask = padded_len != seq_len        # static Python bool

    @pl.when(chunk == 0)
    def _():
        hN_ref[...] = h0_ref[...]
        cN_ref[...] = c0_ref[...]

    # ---- fused input projection for the whole chunk: one big MXU matmul into
    # VMEM scratch (no pre-gates HBM round-trip).
    emb2d = emb_ref[...].reshape(tc * bb, emb_ref.shape[-1])          # (Tc*Bb, E)
    gates_scr[...] = (
        jnp.dot(emb2d, wih_ref[...], preferred_element_type=jnp.float32)
        .reshape(tc, bb, 4 * hidden)
        + bias_ref[...])                                              # f32

    w_hh = whh_ref[...]                                               # (H, 4H) bf16

    def step(t, carry):
        h_prev, c_prev = carry                                        # bf16 / f32 (Bb,H)
        gates = gates_scr[t] + jnp.dot(
            h_prev, w_hh, preferred_element_type=jnp.float32)         # (Bb, 4H) f32
        # torch.nn.LSTM gate order along 4H: [i, f, g, o]
        i_g = jax.nn.sigmoid(gates[:, 0 * hidden:1 * hidden])
        f_g = jax.nn.sigmoid(gates[:, 1 * hidden:2 * hidden])
        g_g = jnp.tanh(gates[:, 2 * hidden:3 * hidden])
        o_g = jax.nn.sigmoid(gates[:, 3 * hidden:4 * hidden])
        c_new = f_g * c_prev + i_g * g_g
        h_new = (o_g * jnp.tanh(c_new)).astype(jnp.bfloat16)
        if needs_tail_mask:
            valid = (chunk * tc + t) < seq_len                        # scalar bool
            h_new = jnp.where(valid, h_new, h_prev)
            c_new = jnp.where(valid, c_new, c_prev)
        hs_ref[t] = h_new
        return (h_new, c_new)

    # Moderate unroll: keeps LLO scheduling visibility without a spill cliff.
    h_fin, c_fin = jax.lax.fori_loop(
        0, tc, step, (hN_ref[...].astype(jnp.bfloat16), cN_ref[...]),
        unroll=min(tc, 4))
    hN_ref[...] = h_fin.astype(jnp.float32)
    cN_ref[...] = c_fin


def init_params(vocab_size, embed_size, hidden_size, key):
    """Deterministic synthetic parameters matching nn.Embedding/LSTM/Linear shapes."""
    ks = jax.random.split(key, 7)
    s = 0.1
    return {
        "embedding": jax.random.normal(ks[0], (vocab_size, embed_size), jnp.float32),
        # torch stores W_ih (4H, E), W_hh (4H, H); kept in that convention.
        "w_ih": s * jax.random.normal(ks[1], (4 * hidden_size, embed_size), jnp.float32),
        "w_hh": s * jax.random.normal(ks[2], (4 * hidden_size, hidden_size), jnp.float32),
        "b_ih": s * jax.random.normal(ks[3], (4 * hidden_size,), jnp.float32),
        "b_hh": s * jax.random.normal(ks[4], (4 * hidden_size,), jnp.float32),
        "fc_w": s * jax.random.normal(ks[5], (vocab_size, hidden_size), jnp.float32),
        "fc_b": s * jax.random.normal(ks[6], (vocab_size,), jnp.float32),
    }


@functools.partial(jax.jit, static_argnames=("time_chunk", "batch_block"))
def embedding_lstm_forward(x_ids, params, hx=None, *, time_chunk=None,
                           batch_block=None):
    """x_ids: (B, T) int32.  Returns (logits (B,T,V), (h_n (1,B,H), c_n (1,B,H)))."""
    B, T = x_ids.shape
    V, E = params["embedding"].shape
    H = params["w_hh"].shape[1]
    assert T >= 1

    # hx=None -> zero initial hidden/cell state (torch semantics)
    if hx is None:
        h0 = jnp.zeros((B, H), jnp.float32)
        c0 = jnp.zeros((B, H), jnp.float32)
    else:
        h0 = hx[0].reshape(B, H).astype(jnp.float32)
        c0 = hx[1].reshape(B, H).astype(jnp.float32)

    # Pad batch to the bf16 sublane-packing multiple (16).
    Bp = _round_up(B, 16)
    Bb = Bp if batch_block is None else batch_block
    assert Bp % Bb == 0 and Bb % 8 == 0
    n_bblocks = Bp // Bb

    if time_chunk is None:
        time_chunk = _pick_time_chunk(T, Bb, E, H)
    Tp = _round_up(T, time_chunk)          # padded length; tail steps masked in-kernel
    n_chunks = Tp // time_chunk

    if Bp != B or Tp != T:
        x_ids = jnp.pad(x_ids, ((0, Bp - B), (0, Tp - T)))
    if Bp != B:
        h0 = jnp.pad(h0, ((0, Bp - B), (0, 0)))
        c0 = jnp.pad(c0, ((0, Bp - B), (0, 0)))

    # ---- glue stage 1: time-major bf16 embedding gather (input projection is
    # fused into the kernel, so no f32 pre-gates array is materialized).
    emb_t = jnp.take(params["embedding"], x_ids.T, axis=0).astype(jnp.bfloat16)  # (Tp, Bp, E)
    wih_T = params["w_ih"].T.astype(jnp.bfloat16)                                # (E, 4H)
    whh_T = params["w_hh"].T.astype(jnp.bfloat16)                                # (H, 4H)
    bias = (params["b_ih"] + params["b_hh"]).astype(jnp.float32).reshape(1, 4 * H)

    kernel = functools.partial(_lstm_chunk_kernel, seq_len=T, padded_len=Tp)
    single = dict(pipeline_mode=pl.Buffered(1))   # constant-index blocks: one buffer

    hs_t, h_n, c_n = pl.pallas_call(
        kernel,
        out_shape=(
            jax.ShapeDtypeStruct((Tp, Bp, H), jnp.bfloat16),   # hidden-state stream
            jax.ShapeDtypeStruct((Bp, H), jnp.float32),        # h_n
            jax.ShapeDtypeStruct((Bp, H), jnp.float32),        # c_n
        ),
        grid_spec=pltpu.PrefetchScalarGridSpec(
            num_scalar_prefetch=0,
            grid=(n_bblocks, n_chunks),                        # (parallel, sequential)
            in_specs=[
                pl.BlockSpec((time_chunk, Bb, E), lambda b, c: (c, b, 0)),   # emb chunk
                pl.BlockSpec((Bb, H), lambda b, c: (b, 0), **single),        # h0
                pl.BlockSpec((Bb, H), lambda b, c: (b, 0), **single),        # c0
                pl.BlockSpec((E, 4 * H), lambda b, c: (0, 0), **single),     # W_ih^T
                pl.BlockSpec((H, 4 * H), lambda b, c: (0, 0), **single),     # W_hh^T
                pl.BlockSpec((1, 4 * H), lambda b, c: (0, 0), **single),     # bias
            ],
            out_specs=[
                pl.BlockSpec((time_chunk, Bb, H), lambda b, c: (c, b, 0)),   # hs (bf16)
                pl.BlockSpec((Bb, H), lambda b, c: (b, 0)),                  # h_n carry
                pl.BlockSpec((Bb, H), lambda b, c: (b, 0)),                  # c_n carry
            ],
            scratch_shapes=[pltpu.VMEM((time_chunk, Bb, 4 * H), jnp.float32)],
        ),
        compiler_params=pltpu.CompilerParams(
            # Batch blocks are independent -> parallel (megacore on v7x);
            # time chunks carry state -> arbitrary (sequential).
            dimension_semantics=("parallel", "arbitrary"),
            vmem_limit_bytes=_VMEM_LIMIT_BYTES,
        ),
    )(emb_t, h0, c0, wih_T, whh_T, bias)

    # ---- glue stage 2: hoisted FC projection; the (t,b)->(b,t) transpose is
    # folded into the einsum operand instead of a separate HBM pass.
    fcw_T = params["fc_w"].T.astype(jnp.bfloat16)                                # (H, V)
    logits = jnp.einsum(
        "tbh,hv->btv", hs_t[:T, :B, :], fcw_T,
        preferred_element_type=jnp.float32) + params["fc_b"]                     # (B, T, V)

    return logits, (h_n[:B][None, ...], c_n[:B][None, ...])


def _reference_forward(x_ids, params, h0, c0):
    """Pure-JAX f32 reference (lax.scan) mirroring torch.nn.LSTM semantics."""
    H = params["w_hh"].shape[1]
    emb = jnp.take(params["embedding"], x_ids, axis=0)              # (B, T, E)
    bias = params["b_ih"] + params["b_hh"]

    def step(carry, x_t):
        h, c = carry
        gates = x_t @ params["w_ih"].T + h @ params["w_hh"].T + bias
        i = jax.nn.sigmoid(gates[:, 0 * H:1 * H])
        f = jax.nn.sigmoid(gates[:, 1 * H:2 * H])
        g = jnp.tanh(gates[:, 2 * H:3 * H])
        o = jax.nn.sigmoid(gates[:, 3 * H:4 * H])
        c = f * c + i * g
        h = o * jnp.tanh(c)
        return (h, c), h

    (h_n, c_n), hs = jax.lax.scan(step, (h0, c0), jnp.transpose(emb, (1, 0, 2)))
    out = jnp.transpose(hs, (1, 0, 2))                              # (B, T, H)
    logits = out @ params["fc_w"].T + params["fc_b"]
    return logits, (h_n[None, ...], c_n[None, ...])


if __name__ == "__main__":
    VOCAB, EMBED, HIDDEN = 32, 16, 32
    B = 2

    key = jax.random.PRNGKey(0)
    k_par, k_x1, k_x2 = jax.random.split(key, 3)
    params = init_params(VOCAB, EMBED, HIDDEN, k_par)

    ok = True
    # (T=8, tc=4): exercises the h/c carry across 2 chunks.
    # (T=7, tc=4): exercises the padded ragged tail + in-kernel step masking.
    for T, tc, kx in ((8, 4, k_x1), (7, 4, k_x2)):
        x = jax.random.randint(kx, (B, T), 0, VOCAB, dtype=jnp.int32)

        # hx=None -> zero initial hidden/cell state (torch semantics).
        logits, (h_n, c_n) = embedding_lstm_forward(x, params, None, time_chunk=tc)
        jax.block_until_ready((logits, h_n, c_n))

        ref_logits, (ref_h, ref_c) = _reference_forward(
            x, params,
            jnp.zeros((B, HIDDEN), jnp.float32),
            jnp.zeros((B, HIDDEN), jnp.float32))

        assert logits.shape == (B, T, VOCAB)
        assert h_n.shape == (1, B, HIDDEN) and c_n.shape == (1, B, HIDDEN)
        # bf16 matmul operands, bf16 recurrent h, f32 accumulation -> loose tol vs f32 ref.
        ok &= bool(jnp.allclose(logits, ref_logits, atol=3e-2, rtol=3e-2))
        ok &= bool(jnp.allclose(h_n, ref_h, atol=3e-2, rtol=3e-2))
        ok &= bool(jnp.allclose(c_n, ref_c, atol=3e-2, rtol=3e-2))

    assert ok
    print("KERNEL_OK")
</pallas_src>

<mosaic_0001>
module attributes {stable_mosaic.version = 11 : i64} {
  func.func @_lstm_chunk_kernel(%arg0: i32, %arg1: i32, %arg2: memref<4x16x16xbf16, #tpu.memory_space<vmem>>, %arg3: memref<16x32xf32, #tpu.memory_space<vmem>>, %arg4: memref<16x32xf32, #tpu.memory_space<vmem>>, %arg5: memref<16x128xbf16, #tpu.memory_space<vmem>>, %arg6: memref<32x128xbf16, #tpu.memory_space<vmem>>, %arg7: memref<1x128xf32, #tpu.memory_space<vmem>>, %arg8: memref<4x16x32xbf16, #tpu.memory_space<vmem>>, %arg9: memref<16x32xf32, #tpu.memory_space<vmem>>, %arg10: memref<16x32xf32, #tpu.memory_space<vmem>>, %arg11: memref<4x16x128xf32, #tpu.memory_space<vmem>>) attributes {dimension_semantics = [#tpu.dimension_semantics<parallel>, #tpu.dimension_semantics<arbitrary>], iteration_bounds = array<i64: 1, 2>, scalar_prefetch = 0 : i64, scratch_operands = 1 : i64, tpu.core_type = #tpu.core_type<tc>, window_params = [{transform_indices = @transform_0, window_bounds = array<i64: 4, 16, 16>}, {pipeline_mode = #tpu.pipeline_mode<synchronous>, transform_indices = @transform_1, window_bounds = array<i64: 16, 32>}, {pipeline_mode = #tpu.pipeline_mode<synchronous>, transform_indices = @transform_2, window_bounds = array<i64: 16, 32>}, {pipeline_mode = #tpu.pipeline_mode<synchronous>, transform_indices = @transform_3, window_bounds = array<i64: 16, 128>}, {pipeline_mode = #tpu.pipeline_mode<synchronous>, transform_indices = @transform_4, window_bounds = array<i64: 32, 128>}, {pipeline_mode = #tpu.pipeline_mode<synchronous>, transform_indices = @transform_5, window_bounds = array<i64: 1, 128>}, {transform_indices = @transform_6, window_bounds = array<i64: 4, 16, 32>}, {transform_indices = @transform_7, window_bounds = array<i64: 16, 32>}, {transform_indices = @transform_8, window_bounds = array<i64: 16, 32>}]} {
    %c0_i32 = arith.constant 0 : i32
    %0 = arith.cmpi eq, %arg1, %c0_i32 : i32
    %1 = arith.extui %0 : i1 to i32
    %c0_i32_0 = arith.constant 0 : i32
    %2 = arith.cmpi ne, %1, %c0_i32_0 : i32
    scf.if %2 {
      %c0_53 = arith.constant 0 : index
      %c0_54 = arith.constant 0 : index
      %160 = vector.load %arg3[%c0_53, %c0_54] : memref<16x32xf32, #tpu.memory_space<vmem>>, vector<16x32xf32>
      %c0_55 = arith.constant 0 : index
      %c0_56 = arith.constant 0 : index
      %161 = vector.load %arg9[%c0_55, %c0_56] : memref<16x32xf32, #tpu.memory_space<vmem>>, vector<16x32xf32>
      tpu.vector_store %arg9[%c0_55, %c0_56], %160 {strides = array<i32>} : memref<16x32xf32, #tpu.memory_space<vmem>>, vector<16x32xf32>,
      %c0_57 = arith.constant 0 : index
      %c0_58 = arith.constant 0 : index
      %162 = vector.load %arg4[%c0_57, %c0_58] : memref<16x32xf32, #tpu.memory_space<vmem>>, vector<16x32xf32>
      %c0_59 = arith.constant 0 : index
      %c0_60 = arith.constant 0 : index
      %163 = vector.load %arg10[%c0_59, %c0_60] : memref<16x32xf32, #tpu.memory_space<vmem>>, vector<16x32xf32>
      tpu.vector_store %arg10[%c0_59, %c0_60], %162 {strides = array<i32>} : memref<16x32xf32, #tpu.memory_space<vmem>>, vector<16x32xf32>,
    } else {
    }
    %c0 = arith.constant 0 : index
    %c0_1 = arith.constant 0 : index
    %c0_2 = arith.constant 0 : index
    %3 = vector.load %arg2[%c0, %c0_1, %c0_2] : memref<4x16x16xbf16, #tpu.memory_space<vmem>>, vector<4x16x16xbf16>
    %4 = vector.shape_cast %3 : vector<4x16x16xbf16> to vector<64x16xbf16>
    %c0_3 = arith.constant 0 : index
    %c0_4 = arith.constant 0 : index
    %5 = vector.load %arg5[%c0_3, %c0_4] : memref<16x128xbf16, #tpu.memory_space<vmem>>, vector<16x128xbf16>
    %cst = arith.constant dense<0.000000e+00> : vector<64x128xf32>
    %6 = tpu.matmul %4, %5, %cst {dimension_numbers = #tpu.dot_dimension_numbers<[1], [0], [0], [1], [0, 0, 1, 1], [], []>} : vector<64x16xbf16>, vector<16x128xbf16>, vector<64x128xf32> -> vector<64x128xf32>
    %7 = vector.shape_cast %6 : vector<64x128xf32> to vector<4x16x128xf32>
    %c0_5 = arith.constant 0 : index
    %c0_6 = arith.constant 0 : index
    %8 = vector.load %arg7[%c0_5, %c0_6] : memref<1x128xf32, #tpu.memory_space<vmem>>, vector<1x128xf32>
    %9 = vector.shape_cast %8 : vector<1x128xf32> to vector<1x1x128xf32>
    %10 = vector.broadcast %9 : vector<1x1x128xf32> to vector<4x16x128xf32>
    %11 = arith.addf %7, %10 : vector<4x16x128xf32>
    %c0_7 = arith.constant 0 : index
    %c0_8 = arith.constant 0 : index
    %c0_9 = arith.constant 0 : index
    %12 = vector.load %arg11[%c0_7, %c0_8, %c0_9] : memref<4x16x128xf32, #tpu.memory_space<vmem>>, vector<4x16x128xf32>
    tpu.vector_store %arg11[%c0_7, %c0_8, %c0_9], %11 {strides = array<i32>} : memref<4x16x128xf32, #tpu.memory_space<vmem>>, vector<4x16x128xf32>,
    %c0_10 = arith.constant 0 : index
    %c0_11 = arith.constant 0 : index
    %13 = vector.load %arg6[%c0_10, %c0_11] : memref<32x128xbf16, #tpu.memory_space<vmem>>, vector<32x128xbf16>
    %c0_12 = arith.constant 0 : index
    %c0_13 = arith.constant 0 : index
    %14 = vector.load %arg9[%c0_12, %c0_13] : memref<16x32xf32, #tpu.memory_space<vmem>>, vector<16x32xf32>
    %15 = arith.truncf %14 : vector<16x32xf32> to vector<16x32xbf16>
    %c0_14 = arith.constant 0 : index
    %c0_15 = arith.constant 0 : index
    %16 = vector.load %arg10[%c0_14, %c0_15] : memref<16x32xf32, #tpu.memory_space<vmem>>, vector<16x32xf32>
    %c0_i32_16 = arith.constant 0 : i32
    %17 = arith.index_cast %c0_i32_16 : i32 to index
    %c0_17 = arith.constant 0 : index
    %c0_18 = arith.constant 0 : index
    %18 = vector.load %arg11[%17, %c0_17, %c0_18] : memref<4x16x128xf32, #tpu.memory_space<vmem>>, vector<1x16x128xf32>
    %19 = vector.shape_cast %18 : vector<1x16x128xf32> to vector<16x128xf32>
    %cst_19 = arith.constant dense<0.000000e+00> : vector<16x128xf32>
    %20 = tpu.matmul %15, %13, %cst_19 {dimension_numbers = #tpu.dot_dimension_numbers<[1], [0], [0], [1], [0, 0, 1, 1], [], []>} : vector<16x32xbf16>, vector<32x128xbf16>, vector<16x128xf32> -> vector<16x128xf32>
    %21 = arith.addf %19, %20 : vector<16x128xf32>
    %22 = vector.extract_strided_slice %21 {offsets = [0, 0], sizes = [16, 32], strides = [1, 1]} : vector<16x128xf32> to vector<16x32xf32>
    %23 = arith.negf %22 : vector<16x32xf32>
    %24 = math.exp %23 : vector<16x32xf32>
    %cst_20 = arith.constant 1.000000e+00 : f32
    %25 = vector.broadcast %cst_20 : f32 to vector<16x32xf32>
    %26 = arith.addf %25, %24 : vector<16x32xf32>
    %27 = arith.divf %25, %26 : vector<16x32xf32>
    %28 = vector.extract_strided_slice %21 {offsets = [0, 32], sizes = [16, 32], strides = [1, 1]} : vector<16x128xf32> to vector<16x32xf32>
    %29 = arith.negf %28 : vector<16x32xf32>
    %30 = math.exp %29 : vector<16x32xf32>
    %cst_21 = arith.constant 1.000000e+00 : f32
    %31 = vector.broadcast %cst_21 : f32 to vector<16x32xf32>
    %32 = arith.addf %31, %30 : vector<16x32xf32>
    %33 = arith.divf %31, %32 : vector<16x32xf32>
    %34 = vector.extract_strided_slice %21 {offsets = [0, 64], sizes = [16, 32], strides = [1, 1]} : vector<16x128xf32> to vector<16x32xf32>
    %35 = math.tanh %34 : vector<16x32xf32>
    %36 = vector.extract_strided_slice %21 {offsets = [0, 96], sizes = [16, 32], strides = [1, 1]} : vector<16x128xf32> to vector<16x32xf32>
    %37 = arith.negf %36 : vector<16x32xf32>
    %38 = math.exp %37 : vector<16x32xf32>
    %cst_22 = arith.constant 1.000000e+00 : f32
    %39 = vector.broadcast %cst_22 : f32 to vector<16x32xf32>
    %40 = arith.addf %39, %38 : vector<16x32xf32>
    %41 = arith.divf %39, %40 : vector<16x32xf32>
    %42 = arith.mulf %33, %16 : vector<16x32xf32>
    %43 = arith.mulf %27, %35 : vector<16x32xf32>
    %44 = arith.addf %42, %43 : vector<16x32xf32>
    %45 = math.tanh %44 : vector<16x32xf32>
    %46 = arith.mulf %41, %45 : vector<16x32xf32>
    %47 = arith.truncf %46 : vector<16x32xf32> to vector<16x32xbf16>
    %48 = arith.index_cast %c0_i32_16 : i32 to index
    %c0_23 = arith.constant 0 : index
    %c0_24 = arith.constant 0 : index
    %49 = vector.load %arg8[%48, %c0_23, %c0_24] : memref<4x16x32xbf16, #tpu.memory_space<vmem>>, vector<1x16x32xbf16>
    %50 = vector.shape_cast %49 : vector<1x16x32xbf16> to vector<16x32xbf16>
    %51 = vector.shape_cast %47 : vector<16x32xbf16> to vector<1x16x32xbf16>
    tpu.vector_store %arg8[%48, %c0_23, %c0_24], %51 {strides = array<i32>} : memref<4x16x32xbf16, #tpu.memory_space<vmem>>, vector<1x16x32xbf16>,
    %c1_i32 = arith.constant 1 : i32
    %52 = arith.index_cast %c1_i32 : i32 to index
    %c0_25 = arith.constant 0 : index
    %c0_26 = arith.constant 0 : index
    %53 = vector.load %arg11[%52, %c0_25, %c0_26] : memref<4x16x128xf32, #tpu.memory_space<vmem>>, vector<1x16x128xf32>
    %54 = vector.shape_cast %53 : vector<1x16x128xf32> to vector<16x128xf32>
    %cst_27 = arith.constant dense<0.000000e+00> : vector<16x128xf32>
    %55 = tpu.matmul %47, %13, %cst_27 {dimension_numbers = #tpu.dot_dimension_numbers<[1], [0], [0], [1], [0, 0, 1, 1], [], []>} : vector<16x32xbf16>, vector<32x128xbf16>, vector<16x128xf32> -> vector<16x128xf32>
    %56 = arith.addf %54, %55 : vector<16x128xf32>
    %57 = vector.extract_strided_slice %56 {offsets = [0, 0], sizes = [16, 32], strides = [1, 1]} : vector<16x128xf32> to vector<16x32xf32>
    %58 = arith.negf %57 : vector<16x32xf32>
    %59 = math.exp %58 : vector<16x32xf32>
    %cst_28 = arith.constant 1.000000e+00 : f32
    %60 = vector.broadcast %cst_28 : f32 to vector<16x32xf32>
    %61 = arith.addf %60, %59 : vector<16x32xf32>
    %62 = arith.divf %60, %61 : vector<16x32xf32>
    %63 = vector.extract_strided_slice %56 {offsets = [0, 32], sizes = [16, 32], strides = [1, 1]} : vector<16x128xf32> to vector<16x32xf32>
    %64 = arith.negf %63 : vector<16x32xf32>
    %65 = math.exp %64 : vector<16x32xf32>
    %cst_29 = arith.constant 1.000000e+00 : f32
    %66 = vector.broadcast %cst_29 : f32 to vector<16x32xf32>
    %67 = arith.addf %66, %65 : vector<16x32xf32>
    %68 = arith.divf %66, %67 : vector<16x32xf32>
    %69 = vector.extract_strided_slice %56 {offsets = [0, 64], sizes = [16, 32], strides = [1, 1]} : vector<16x128xf32> to vector<16x32xf32>
    %70 = math.tanh %69 : vector<16x32xf32>
    %71 = vector.extract_strided_slice %56 {offsets = [0, 96], sizes = [16, 32], strides = [1, 1]} : vector<16x128xf32> to vector<16x32xf32>
    %72 = arith.negf %71 : vector<16x32xf32>
    %73 = math.exp %72 : vector<16x32xf32>
    %cst_30 = arith.constant 1.000000e+00 : f32
    %74 = vector.broadcast %cst_30 : f32 to vector<16x32xf32>
    %75 = arith.addf %74, %73 : vector<16x32xf32>
    %76 = arith.divf %74, %75 : vector<16x32xf32>
    %77 = arith.mulf %68, %44 : vector<16x32xf32>
    %78 = arith.mulf %62, %70 : vector<16x32xf32>
    %79 = arith.addf %77, %78 : vector<16x32xf32>
    %80 = math.tanh %79 : vector<16x32xf32>
    %81 = arith.mulf %76, %80 : vector<16x32xf32>
    %82 = arith.truncf %81 : vector<16x32xf32> to vector<16x32xbf16>
    %83 = arith.index_cast %c1_i32 : i32 to index
    %c0_31 = arith.constant 0 : index
    %c0_32 = arith.constant 0 : index
    %84 = vector.load %arg8[%83, %c0_31, %c0_32] : memref<4x16x32xbf16, #tpu.memory_space<vmem>>, vector<1x16x32xbf16>
    %85 = vector.shape_cast %84 : vector<1x16x32xbf16> to vector<16x32xbf16>
    %86 = vector.shape_cast %82 : vector<16x32xbf16> to vector<1x16x32xbf16>
    tpu.vector_store %arg8[%83, %c0_31, %c0_32], %86 {strides = array<i32>} : memref<4x16x32xbf16, #tpu.memory_space<vmem>>, vector<1x16x32xbf16>,
    %c2_i32 = arith.constant 2 : i32
    %87 = arith.index_cast %c2_i32 : i32 to index
    %c0_33 = arith.constant 0 : index
    %c0_34 = arith.constant 0 : index
    %88 = vector.load %arg11[%87, %c0_33, %c0_34] : memref<4x16x128xf32, #tpu.memory_space<vmem>>, vector<1x16x128xf32>
    %89 = vector.shape_cast %88 : vector<1x16x128xf32> to vector<16x128xf32>
    %cst_35 = arith.constant dense<0.000000e+00> : vector<16x128xf32>
    %90 = tpu.matmul %82, %13, %cst_35 {dimension_numbers = #tpu.dot_dimension_numbers<[1], [0], [0], [1], [0, 0, 1, 1], [], []>} : vector<16x32xbf16>, vector<32x128xbf16>, vector<16x128xf32> -> vector<16x128xf32>
    %91 = arith.addf %89, %90 : vector<16x128xf32>
    %92 = vector.extract_strided_slice %91 {offsets = [0, 0], sizes = [16, 32], strides = [1, 1]} : vector<16x128xf32> to vector<16x32xf32>
    %93 = arith.negf %92 : vector<16x32xf32>
    %94 = math.exp %93 : vector<16x32xf32>
    %cst_36 = arith.constant 1.000000e+00 : f32
    %95 = vector.broadcast %cst_36 : f32 to vector<16x32xf32>
    %96 = arith.addf %95, %94 : vector<16x32xf32>
    %97 = arith.divf %95, %96 : vector<16x32xf32>
    %98 = vector.extract_strided_slice %91 {offsets = [0, 32], sizes = [16, 32], strides = [1, 1]} : vector<16x128xf32> to vector<16x32xf32>
    %99 = arith.negf %98 : vector<16x32xf32>
    %100 = math.exp %99 : vector<16x32xf32>
    %cst_37 = arith.constant 1.000000e+00 : f32
    %101 = vector.broadcast %cst_37 : f32 to vector<16x32xf32>
    %102 = arith.addf %101, %100 : vector<16x32xf32>
    %103 = arith.divf %101, %102 : vector<16x32xf32>
    %104 = vector.extract_strided_slice %91 {offsets = [0, 64], sizes = [16, 32], strides = [1, 1]} : vector<16x128xf32> to vector<16x32xf32>
    %105 = math.tanh %104 : vector<16x32xf32>
    %106 = vector.extract_strided_slice %91 {offsets = [0, 96], sizes = [16, 32], strides = [1, 1]} : vector<16x128xf32> to vector<16x32xf32>
    %107 = arith.negf %106 : vector<16x32xf32>
    %108 = math.exp %107 : vector<16x32xf32>
    %cst_38 = arith.constant 1.000000e+00 : f32
    %109 = vector.broadcast %cst_38 : f32 to vector<16x32xf32>
    %110 = arith.addf %109, %108 : vector<16x32xf32>
    %111 = arith.divf %109, %110 : vector<16x32xf32>
    %112 = arith.mulf %103, %79 : vector<16x32xf32>
    %113 = arith.mulf %97, %105 : vector<16x32xf32>
    %114 = arith.addf %112, %113 : vector<16x32xf32>
    %115 = math.tanh %114 : vector<16x32xf32>
    %116 = arith.mulf %111, %115 : vector<16x32xf32>
    %117 = arith.truncf %116 : vector<16x32xf32> to vector<16x32xbf16>
    %118 = arith.index_cast %c2_i32 : i32 to index
    %c0_39 = arith.constant 0 : index
    %c0_40 = arith.constant 0 : index
    %119 = vector.load %arg8[%118, %c0_39, %c0_40] : memref<4x16x32xbf16, #tpu.memory_space<vmem>>, vector<1x16x32xbf16>
    %120 = vector.shape_cast %119 : vector<1x16x32xbf16> to vector<16x32xbf16>
    %121 = vector.shape_cast %117 : vector<16x32xbf16> to vector<1x16x32xbf16>
    tpu.vector_store %arg8[%118, %c0_39, %c0_40], %121 {strides = array<i32>} : memref<4x16x32xbf16, #tpu.memory_space<vmem>>, vector<1x16x32xbf16>,
    %c3_i32 = arith.constant 3 : i32
    %122 = arith.index_cast %c3_i32 : i32 to index
    %c0_41 = arith.constant 0 : index
    %c0_42 = arith.constant 0 : index
    %123 = vector.load %arg11[%122, %c0_41, %c0_42] : memref<4x16x128xf32, #tpu.memory_space<vmem>>, vector<1x16x128xf32>
    %124 = vector.shape_cast %123 : vector<1x16x128xf32> to vector<16x128xf32>
    %cst_43 = arith.constant dense<0.000000e+00> : vector<16x128xf32>
    %125 = tpu.matmul %117, %13, %cst_43 {dimension_numbers = #tpu.dot_dimension_numbers<[1], [0], [0], [1], [0, 0, 1, 1], [], []>} : vector<16x32xbf16>, vector<32x128xbf16>, vector<16x128xf32> -> vector<16x128xf32>
    %126 = arith.addf %124, %125 : vector<16x128xf32>
    %127 = vector.extract_strided_slice %126 {offsets = [0, 0], sizes = [16, 32], strides = [1, 1]} : vector<16x128xf32> to vector<16x32xf32>
    %128 = arith.negf %127 : vector<16x32xf32>
    %129 = math.exp %128 : vector<16x32xf32>
    %cst_44 = arith.constant 1.000000e+00 : f32
    %130 = vector.broadcast %cst_44 : f32 to vector<16x32xf32>
    %131 = arith.addf %130, %129 : vector<16x32xf32>
    %132 = arith.divf %130, %131 : vector<16x32xf32>
    %133 = vector.extract_strided_slice %126 {offsets = [0, 32], sizes = [16, 32], strides = [1, 1]} : vector<16x128xf32> to vector<16x32xf32>
    %134 = arith.negf %133 : vector<16x32xf32>
    %135 = math.exp %134 : vector<16x32xf32>
    %cst_45 = arith.constant 1.000000e+00 : f32
    %136 = vector.broadcast %cst_45 : f32 to vector<16x32xf32>
    %137 = arith.addf %136, %135 : vector<16x32xf32>
    %138 = arith.divf %136, %137 : vector<16x32xf32>
    %139 = vector.extract_strided_slice %126 {offsets = [0, 64], sizes = [16, 32], strides = [1, 1]} : vector<16x128xf32> to vector<16x32xf32>
    %140 = math.tanh %139 : vector<16x32xf32>
    %141 = vector.extract_strided_slice %126 {offsets = [0, 96], sizes = [16, 32], strides = [1, 1]} : vector<16x128xf32> to vector<16x32xf32>
    %142 = arith.negf %141 : vector<16x32xf32>
    %143 = math.exp %142 : vector<16x32xf32>
    %cst_46 = arith.constant 1.000000e+00 : f32
    %144 = vector.broadcast %cst_46 : f32 to vector<16x32xf32>
    %145 = arith.addf %144, %143 : vector<16x32xf32>
    %146 = arith.divf %144, %145 : vector<16x32xf32>
    %147 = arith.mulf %138, %114 : vector<16x32xf32>
    %148 = arith.mulf %132, %140 : vector<16x32xf32>
    %149 = arith.addf %147, %148 : vector<16x32xf32>
    %150 = math.tanh %149 : vector<16x32xf32>
    %151 = arith.mulf %146, %150 : vector<16x32xf32>
    %152 = arith.truncf %151 : vector<16x32xf32> to vector<16x32xbf16>
    %153 = arith.index_cast %c3_i32 : i32 to index
    %c0_47 = arith.constant 0 : index
    %c0_48 = arith.constant 0 : index
    %154 = vector.load %arg8[%153, %c0_47, %c0_48] : memref<4x16x32xbf16, #tpu.memory_space<vmem>>, vector<1x16x32xbf16>
    %155 = vector.shape_cast %154 : vector<1x16x32xbf16> to vector<16x32xbf16>
    %156 = vector.shape_cast %152 : vector<16x32xbf16> to vector<1x16x32xbf16>
    tpu.vector_store %arg8[%153, %c0_47, %c0_48], %156 {strides = array<i32>} : memref<4x16x32xbf16, #tpu.memory_space<vmem>>, vector<1x16x32xbf16>,
    %c4_i32 = arith.constant 4 : i32
    %157 = arith.extf %152 : vector<16x32xbf16> to vector<16x32xf32>
    %c0_49 = arith.constant 0 : index
    %c0_50 = arith.constant 0 : index
    %158 = vector.load %arg9[%c0_49, %c0_50] : memref<16x32xf32, #tpu.memory_space<vmem>>, vector<16x32xf32>
    tpu.vector_store %arg9[%c0_49, %c0_50], %157 {strides = array<i32>} : memref<16x32xf32, #tpu.memory_space<vmem>>, vector<16x32xf32>,
    %c0_51 = arith.constant 0 : index
    %c0_52 = arith.constant 0 : index
    %159 = vector.load %arg10[%c0_51, %c0_52] : memref<16x32xf32, #tpu.memory_space<vmem>>, vector<16x32xf32>
    tpu.vector_store %arg10[%c0_51, %c0_52], %149 {strides = array<i32>} : memref<16x32xf32, #tpu.memory_space<vmem>>, vector<16x32xf32>,
    return
  }
  func.func @transform_0(%arg0: i32, %arg1: i32) -> (i32, i32, i32) {
    %c0_i32 = arith.constant 0 : i32
    %c0_i32_0 = arith.constant 0 : i32
    return %arg1, %arg0, %c0_i32 : i32, i32, i32
  }
  func.func @transform_1(%arg0: i32, %arg1: i32) -> (i32, i32) {
    %c0_i32 = arith.constant 0 : i32
    %c0_i32_0 = arith.constant 0 : i32
    return %arg0, %c0_i32 : i32, i32
  }
  func.func @transform_2(%arg0: i32, %arg1: i32) -> (i32, i32) {
    %c0_i32 = arith.constant 0 : i32
    %c0_i32_0 = arith.constant 0 : i32
    return %arg0, %c0_i32 : i32, i32
  }
  func.func @transform_3(%arg0: i32, %arg1: i32) -> (i32, i32) {
    %c0_i32 = arith.constant 0 : i32
    %c0_i32_0 = arith.constant 0 : i32
    %c0_i32_1 = arith.constant 0 : i32
    return %c0_i32, %c0_i32_0 : i32, i32
  }
  func.func @transform_4(%arg0: i32, %arg1: i32) -> (i32, i32) {
    %c0_i32 = arith.constant 0 : i32
    %c0_i32_0 = arith.constant 0 : i32
    %c0_i32_1 = arith.constant 0 : i32
    return %c0_i32, %c0_i32_0 : i32, i32
  }
  func.func @transform_5(%arg0: i32, %arg1: i32) -> (i32, i32) {
    %c0_i32 = arith.constant 0 : i32
    %c0_i32_0 = arith.constant 0 : i32
    %c0_i32_1 = arith.constant 0 : i32
    return %c0_i32, %c0_i32_0 : i32, i32
  }
  func.func @transform_6(%arg0: i32, %arg1: i32) -> (i32, i32, i32) {
    %c0_i32 = arith.constant 0 : i32
    %c0_i32_0 = arith.constant 0 : i32
    return %arg1, %arg0, %c0_i32 : i32, i32, i32
  }
  func.func @transform_7(%arg0: i32, %arg1: i32) -> (i32, i32) {
    %c0_i32 = arith.constant 0 : i32
    %c0_i32_0 = arith.constant 0 : i32
    return %arg0, %c0_i32 : i32, i32
  }
  func.func @transform_8(%arg0: i32, %arg1: i32) -> (i32, i32) {
    %c0_i32 = arith.constant 0 : i32
    %c0_i32_0 = arith.constant 0 : i32
    return %arg0, %c0_i32 : i32, i32
  }
}

</mosaic_0001>

<llo_original>
// kernel: embedding_lstm_forward.1
$region0: #{embedding_lstm_forward.1}
  #allocation0 [shape = 'u32[]', space=smem, size = 0x4, offset = 0x4, fixed_abs, tag = 'smem constant byte address 0x4 - core index']
  #allocation1 [shape = 'u32[144,128]{1,0:T(1,128)}', space=vmem, size = 0x12000, scoped, tag = 'internal scratch']
  #allocation2 [shape = 'f32[4,16,128]{2,1,0:T(8,128)}', space=vmem, size = 0x8000, scoped, tag = 'scratch operand']
  %s0 = inlined_call_operand.vmem [shape: bf16[8,16,16], index: 0, kind: input, shape index: {}]
  %s1 = inlined_call_operand.vmem [shape: f32[16,32], index: 1, kind: input, shape index: {}, may-alias: {1,2}]
  %s2 = inlined_call_operand.vmem [shape: f32[16,32], index: 2, kind: input, shape index: {}, may-alias: {1,2}]
  %s3 = inlined_call_operand.vmem [shape: bf16[16,128], index: 3, kind: input, shape index: {}]
  %s4 = inlined_call_operand.vmem [shape: bf16[32,128], index: 4, kind: input, shape index: {}]
  %s5 = inlined_call_operand.vmem [shape: f32[1,128], index: 5, kind: input, shape index: {}]
  %s6 = inlined_call_operand.vmem [shape: bf16[8,16,32], index: 6, kind: output, shape index: {0}]
  %s7 = inlined_call_operand.vmem [shape: f32[16,32], index: 7, kind: output, shape index: {1}]
  %s8 = inlined_call_operand.vmem [shape: f32[16,32], index: 8, kind: output, shape index: {2}]
  %9 = xla_tuple %s6, %s7, %s8
  %s10 = sld [smem:[#allocation0]]
  $region77: #{embedding_lstm_forward.1} parent=0
    _
  %s12 = ssub.s32 1, %s10
  %s13 = scalar_select 0, %s12, %s10
  loop: start=0, step=1, limit=4
  $region2: #{embedding_lstm_forward.1} parent=0 // loop_pre_header
    _
  $region3: #{embedding_lstm_forward.1} parent=0 // loop_header
    %s15 = sphi 0, %s19
    %p16 = scmp.ge.s32.totalorder %s15, 4
    %s22 = sphi 0, %s34
    %s23 = sphi 0, %s30
    %s24 = sphi 0, %s22
    %s25 = sphi 0, %s23
    %s26 = sphi 0, %s24
    %s27 = sphi 0, %s25
    %s39 = sphi 0, %s41
    %s42 = sphi 0, %s39
    %s43 = sphi 0, %s42
    %s59 = sphi 0, %s43
    %s65 = sphi 0, %s67
    %s68 = sphi 0, %s65
    %s69 = sphi 0, %s68
    %s85 = sphi 0, %s69
    %s91 = sphi 0, %s93
    %s94 = sphi 0, %s91
    %s95 = sphi 0, %s94
    %s111 = sphi 0, %s95
    %s115 = sphi 0, %s115
    %s117 = sphi 0, %s115
    %s118 = sphi 0, %s117
    %s132 = sphi 0, %s118
    %s136 = sphi 0, %s136
    %s138 = sphi 0, %s136
    %s139 = sphi 0, %s138
    %s153 = sphi 0, %s139
    %s157 = sphi 0, %s157
    %s159 = sphi 0, %s157
    %s160 = sphi 0, %s159
    %s174 = sphi 0, %s160
    %s182 = sphi 0, %s184
    %s185 = sphi 0, %s182
    %s186 = sphi 0, %s185
    %s202 = sphi 0, %s186
    %s208 = sphi 0, %s210
    %s211 = sphi 0, %s208
    %s212 = sphi 0, %s211
    %s228 = sphi 0, %s212
    %s234 = sphi 0, %s236
    %s237 = sphi 0, %s234
    %s238 = sphi 0, %s237
    %s254 = sphi 0, %s238
  $region4: #{embedding_lstm_forward.1} parent=0 // loop_header_branch
    %18 = sbr.rel (%p16) target = $region8
  $region5: #{embedding_lstm_forward.1} parent=0 // loop_body
    %s20 = ssub.s32 %s15, 1
    %s21 = ssub.s32 %s15, 2
    %s28 = sadd.s32 1, %s23
    %p29 = scmp.ge.s32.totalorder %s28, 2
    %s30 = scalar_select %p29, 0, %s28
    %s31 = sadd.s32 1, %s22
    %s32 = scalar_select %p29, %s31, %s22
    %p33 = scmp.ge.s32.totalorder %s32, 1
    %s34 = scalar_select %p33, 0, %s32
    %s35 = ssub.s32 %s23, %s30
    %s36 = ssub.s32 %s22, %s34
    %s37 = sor.u32 %s35, %s36
    %p38 = scmp.eq.s32.totalorder %s37, 0
    %s40 = sadd.s32 %s39, 1
    %s41 = scalar_select %p38, %s39, %s40
    %p44 = pneg %p38
    %p45 = scmp.eq.s32.totalorder %s15, 1
    %p46 = por %p44, %p45
    %p47 = scmp.ne.s32.totalorder %s39, %s42
    %p48 = scmp.eq.s32.totalorder %s15, 0
    %p49 = por %p47, %p48
    %p50 = scmp.ne.s32.totalorder %s39, %s42
    %p51 = scmp.eq.s32.totalorder %s20, 1
    %p52 = por %p50, %p51
    %p53 = scmp.ne.s32.totalorder %s42, %s43
    %p54 = scmp.eq.s32.totalorder %s20, 0
    %p55 = por %p53, %p54
    %p56 = scmp.ne.s32.totalorder %s42, %s43
    %p57 = scmp.eq.s32.totalorder %s21, 1
    %p58 = por %p56, %p57
    %p60 = scmp.ne.s32.totalorder %s43, %s59
    %p61 = scmp.eq.s32.totalorder %s21, 0
    %p62 = por %p60, %p61
    %s63 = ssub.s32 %s22, %s34
    %p64 = scmp.eq.s32.totalorder %s63, 0
    %s66 = sadd.s32 %s65, 1
    %s67 = scalar_select %p64, %s65, %s66
    %p70 = pneg %p64
    %p71 = scmp.eq.s32.totalorder %s15, 1
    %p72 = por %p70, %p71
    %p73 = scmp.ne.s32.totalorder %s65, %s68
    %p74 = scmp.eq.s32.totalorder %s15, 0
    %p75 = por %p73, %p74
    %p76 = scmp.ne.s32.totalorder %s65, %s68
    %p77 = scmp.eq.s32.totalorder %s20, 1
    %p78 = por %p76, %p77
    %p79 = scmp.ne.s32.totalorder %s68, %s69
    %p80 = scmp.eq.s32.totalorder %s20, 0
    %p81 = por %p79, %p80
    %p82 = scmp.ne.s32.totalorder %s68, %s69
    %p83 = scmp.eq.s32.totalorder %s21, 1
    %p84 = por %p82, %p83
    %p86 = scmp.ne.s32.totalorder %s69, %s85
    %p87 = scmp.eq.s32.totalorder %s21, 0
    %p88 = por %p86, %p87
    %s89 = ssub.s32 %s22, %s34
    %p90 = scmp.eq.s32.totalorder %s89, 0
    %s92 = sadd.s32 %s91, 1
    %s93 = scalar_select %p90, %s91, %s92
    %p96 = pneg %p90
    %p97 = scmp.eq.s32.totalorder %s15, 1
    %p98 = por %p96, %p97
    %p99 = scmp.ne.s32.totalorder %s91, %s94
    %p100 = scmp.eq.s32.totalorder %s15, 0
    %p101 = por %p99, %p100
    %p102 = scmp.ne.s32.totalorder %s91, %s94
    %p103 = scmp.eq.s32.totalorder %s20, 1
    %p104 = por %p102, %p103
    %p105 = scmp.ne.s32.totalorder %s94, %s95
    %p106 = scmp.eq.s32.totalorder %s20, 0
    %p107 = por %p105, %p106
    %p108 = scmp.ne.s32.totalorder %s94, %s95
    %p109 = scmp.eq.s32.totalorder %s21, 1
    %p110 = por %p108, %p109
    %p112 = scmp.ne.s32.totalorder %s95, %s111
    %p113 = scmp.eq.s32.totalorder %s21, 0
    %p114 = por %p112, %p113
    %s116 = sadd.s32 %s115, 1
    %p119 = scmp.eq.s32.totalorder %s15, 1
    %p120 = scmp.ne.s32.totalorder %s115, %s117
    %p121 = scmp.eq.s32.totalorder %s15, 0
    %p122 = por %p120, %p121
    %p123 = scmp.ne.s32.totalorder %s115, %s117
    %p124 = scmp.eq.s32.totalorder %s20, 1
    %p125 = por %p123, %p124
    %p126 = scmp.ne.s32.totalorder %s117, %s118
    %p127 = scmp.eq.s32.totalorder %s20, 0
    %p128 = por %p126, %p127
    %p129 = scmp.ne.s32.totalorder %s117, %s118
    %p130 = scmp.eq.s32.totalorder %s21, 1
    %p131 = por %p129, %p130
    %p133 = scmp.ne.s32.totalorder %s118, %s132
    %p134 = scmp.eq.s32.totalorder %s21, 0
    %p135 = por %p133, %p134
    %s137 = sadd.s32 %s136, 1
    %p140 = scmp.eq.s32.totalorder %s15, 1
    %p141 = scmp.ne.s32.totalorder %s136, %s138
    %p142 = scmp.eq.s32.totalorder %s15, 0
    %p143 = por %p141, %p142
    %p144 = scmp.ne.s32.totalorder %s136, %s138
    %p145 = scmp.eq.s32.totalorder %s20, 1
    %p146 = por %p144, %p145
    %p147 = scmp.ne.s32.totalorder %s138, %s139
    %p148 = scmp.eq.s32.totalorder %s20, 0
    %p149 = por %p147, %p148
    %p150 = scmp.ne.s32.totalorder %s138, %s139
    %p151 = scmp.eq.s32.totalorder %s21, 1
    %p152 = por %p150, %p151
    %p154 = scmp.ne.s32.totalorder %s139, %s153
    %p155 = scmp.eq.s32.totalorder %s21, 0
    %p156 = por %p154, %p155
    %s158 = sadd.s32 %s157, 1
    %p161 = scmp.eq.s32.totalorder %s15, 1
    %p162 = scmp.ne.s32.totalorder %s157, %s159
    %p163 = scmp.eq.s32.totalorder %s15, 0
    %p164 = por %p162, %p163
    %p165 = scmp.ne.s32.totalorder %s157, %s159
    %p166 = scmp.eq.s32.totalorder %s20, 1
    %p167 = por %p165, %p166
    %p168 = scmp.ne.s32.totalorder %s159, %s160
    %p169 = scmp.eq.s32.totalorder %s20, 0
    %p170 = por %p168, %p169
    %p171 = scmp.ne.s32.totalorder %s159, %s160
    %p172 = scmp.eq.s32.totalorder %s21, 1
    %p173 = por %p171, %p172
    %p175 = scmp.ne.s32.totalorder %s160, %s174
    %p176 = scmp.eq.s32.totalorder %s21, 0
    %p177 = por %p175, %p176
    %s178 = ssub.s32 %s23, %s30
    %s179 = ssub.s32 %s22, %s34
    %s180 = sor.u32 %s178, %s179
    %p181 = scmp.eq.s32.totalorder %s180, 0
    %s183 = sadd.s32 %s182, 1
    %s184 = scalar_select %p181, %s182, %s183
    %p187 = pneg %p181
    %p188 = scmp.eq.s32.totalorder %s15, 1
    %p189 = por %p187, %p188
    %p190 = scmp.ne.s32.totalorder %s182, %s185
    %p191 = scmp.eq.s32.totalorder %s15, 0
    %p192 = por %p190, %p191
    %p193 = scmp.ne.s32.totalorder %s182, %s185
    %p194 = scmp.eq.s32.totalorder %s20, 1
    %p195 = por %p193, %p194
    %p196 = scmp.ne.s32.totalorder %s185, %s186
    %p197 = scmp.eq.s32.totalorder %s20, 0
    %p198 = por %p196, %p197
    %p199 = scmp.ne.s32.totalorder %s185, %s186
    %p200 = scmp.eq.s32.totalorder %s21, 1
    %p201 = por %p199, %p200
    %p203 = scmp.ne.s32.totalorder %s186, %s202
    %p204 = scmp.eq.s32.totalorder %s21, 0
    %p205 = por %p203, %p204
    %s206 = ssub.s32 %s22, %s34
    %p207 = scmp.eq.s32.totalorder %s206, 0
    %s209 = sadd.s32 %s208, 1
    %s210 = scalar_select %p207, %s208, %s209
    %p213 = pneg %p207
    %p214 = scmp.eq.s32.totalorder %s15, 1
    %p215 = por %p213, %p214
    %p216 = scmp.ne.s32.totalorder %s208, %s211
    %p217 = scmp.eq.s32.totalorder %s15, 0
    %p218 = por %p216, %p217
    %p219 = scmp.ne.s32.totalorder %s208, %s211
    %p220 = scmp.eq.s32.totalorder %s20, 1
    %p221 = por %p219, %p220
    %p222 = scmp.ne.s32.totalorder %s211, %s212
    %p223 = scmp.eq.s32.totalorder %s20, 0
    %p224 = por %p222, %p223
    %p225 = scmp.ne.s32.totalorder %s211, %s212
    %p226 = scmp.eq.s32.totalorder %s21, 1
    %p227 = por %p225, %p226
    %p229 = scmp.ne.s32.totalorder %s212, %s228
    %p230 = scmp.eq.s32.totalorder %s21, 0
    %p231 = por %p229, %p230
    %s232 = ssub.s32 %s22, %s34
    %p233 = scmp.eq.s32.totalorder %s232, 0
    %s235 = sadd.s32 %s234, 1
    %s236 = scalar_select %p233, %s234, %s235
    %p239 = pneg %p233
    %p240 = scmp.eq.s32.totalorder %s15, 1
    %p241 = por %p239, %p240
    %p242 = scmp.ne.s32.totalorder %s234, %s237
    %p243 = scmp.eq.s32.totalorder %s15, 0
    %p244 = por %p242, %p243
    %p245 = scmp.ne.s32.totalorder %s234, %s237
    %p246 = scmp.eq.s32.totalorder %s20, 1
    %p247 = por %p245, %p246
    %p248 = scmp.ne.s32.totalorder %s237, %s238
    %p249 = scmp.eq.s32.totalorder %s20, 0
    %p250 = por %p248, %p249
    %p251 = scmp.ne.s32.totalorder %s237, %s238
    %p252 = scmp.eq.s32.totalorder %s21, 1
    %p253 = por %p251, %p252
    %p255 = scmp.ne.s32.totalorder %s238, %s254
    %p256 = scmp.eq.s32.totalorder %s21, 0
    %p257 = por %p255, %p256
    %p258 = scmp.le.s32.totalorder 1, %s15
    %p259 = scmp.lt.s32.totalorder %s15, 3
    %p260 = pnand %p258, %p259
    %p261 = pneg %p260
    // Predicated region
    $region9: #{embedding_lstm_forward.1} parent=5 // pred_check
      _
    $region10: #{embedding_lstm_forward.1} parent=5 // pred_check_branch
      %263 = sbr.rel (%p260) target = $region12
    $region11: #{embedding_lstm_forward.1} parent=5 // pred_region
      %s264 = ssub.s32 %s15, 1
      // Predicated region
      $region13: #{embedding_lstm_forward.1} parent=11 // pred_check
        %p265 = pneg %p81
      $region14: #{embedding_lstm_forward.1} parent=11 // pred_check_branch
        %267 = sbr.rel (%p265) target = $region16
      $region15: #{embedding_lstm_forward.1} parent=11 // pred_region
        %s268 = smul.u32 2, %s24
        %p269 = scmp.lt.s32.totalorder %s268, 1
        %s270 = scalar_select %p269, %s268, 1
        %s271 = smul.addr %s270, 8
        %s272 = scalar_lea.vmem %s1, %s271
        %s273 = smul.u32 2, %s24
      $region16: #{embedding_lstm_forward.1} parent=11 // pred_fallthru
        _
      // Predicated region
      $region17: #{embedding_lstm_forward.1} parent=11 // pred_check
        %p274 = pneg %p107
      $region18: #{embedding_lstm_forward.1} parent=11 // pred_check_branch
        %276 = sbr.rel (%p274) target = $region20
      $region19: #{embedding_lstm_forward.1} parent=11 // pred_region
        %s277 = smul.u32 2, %s24
        %p278 = scmp.lt.s32.totalorder %s277, 1
        %s279 = scalar_select %p278, %s277, 1
        %s280 = smul.addr %s279, 8
        %s281 = scalar_lea.vmem %s2, %s280
        %s282 = smul.u32 2, %s24
      $region20: #{embedding_lstm_forward.1} parent=11 // pred_fallthru
        _
      // Predicated region
      $region21: #{embedding_lstm_forward.1} parent=11 // pred_check
        %p283 = pneg %p128
      $region22: #{embedding_lstm_forward.1} parent=11 // pred_check_branch
        %285 = sbr.rel (%p283) target = $region24
      $region23: #{embedding_lstm_forward.1} parent=11 // pred_region
        _
      $region24: #{embedding_lstm_forward.1} parent=11 // pred_fallthru
        _
      // Predicated region
      $region25: #{embedding_lstm_forward.1} parent=11 // pred_check
        %p286 = pneg %p149
      $region26: #{embedding_lstm_forward.1} parent=11 // pred_check_branch
        %288 = sbr.rel (%p286) target = $region28
      $region27: #{embedding_lstm_forward.1} parent=11 // pred_region
        _
      $region28: #{embedding_lstm_forward.1} parent=11 // pred_fallthru
        _
      // Predicated region
      $region29: #{embedding_lstm_forward.1} parent=11 // pred_check
        %p289 = pneg %p170
      $region30: #{embedding_lstm_forward.1} parent=11 // pred_check_branch
        %291 = sbr.rel (%p289) target = $region32
      $region31: #{embedding_lstm_forward.1} parent=11 // pred_region
        _
      $region32: #{embedding_lstm_forward.1} parent=11 // pred_fallthru
        _
    $region12: #{embedding_lstm_forward.1} parent=5 // pred_fallthru
      _
    %p292 = scmp.lt.s32.totalorder %s15, 2
    // Predicated region
    $region33: #{embedding_lstm_forward.1} parent=5 // pred_check
      %p293 = pneg %p292
    $region34: #{embedding_lstm_forward.1} parent=5 // pred_check_branch
      %295 = sbr.rel (%p293) target = $region36
    $region35: #{embedding_lstm_forward.1} parent=5 // pred_region
      // Predicated region
      $region37: #{embedding_lstm_forward.1} parent=35 // pred_check
        %p296 = pneg %p49
      $region38: #{embedding_lstm_forward.1} parent=35 // pred_check_branch
        %298 = sbr.rel (%p296) target = $region40
      $region39: #{embedding_lstm_forward.1} parent=35 // pred_region
        %s299 = smul.u32 4, %s23
        %s300 = smul.u32 2, %s22
        %p301 = scmp.lt.s32.totalorder %s299, 7
        %s302 = scalar_select %p301, %s299, 7
        %p303 = scmp.lt.s32.totalorder %s300, 1
        %s304 = scalar_select %p303, %s300, 1
        %s305 = smul.addr %s302, 2
        %s306 = sadd.s32 %s304, %s305
        %s307 = smul.addr %s306, 4
        %s308 = scalar_lea.vmem %s0, %s307
        %s309 = smul.u32 4, %s23
        %s310 = smul.u32 2, %s22
      $region40: #{embedding_lstm_forward.1} parent=35 // pred_fallthru
        _
    $region36: #{embedding_lstm_forward.1} parent=5 // pred_fallthru
      _
    %p311 = scmp.le.s32.totalorder 1, %s15
    %p312 = scmp.lt.s32.totalorder %s15, 3
    %p313 = pnand %p311, %p312
    %p314 = pneg %p313
    // Predicated region
    $region41: #{embedding_lstm_forward.1} parent=5 // pred_check
      _
    $region42: #{embedding_lstm_forward.1} parent=5 // pred_check_branch
      %316 = sbr.rel (%p313) target = $region44
    $region43: #{embedding_lstm_forward.1} parent=5 // pred_region
      %s317 = ssub.s32 %s15, 1
      %s318 = smul.u32 4, %s25
      %s319 = smul.u32 2, %s24
      %p320 = scmp.lt.s32.totalorder %s318, 7
      %s321 = scalar_select %p320, %s318, 7
      %p322 = scmp.lt.s32.totalorder %s319, 1
      %s323 = scalar_select %p322, %s319, 1
      %s324 = smul.addr %s321, 2
      %s325 = sadd.s32 %s323, %s324
      %s326 = smul.addr %s325, 4
      %s327 = scalar_lea.vmem %s0, %s326
      %p328 = pneg %p55
      %p329 = pneg %p52
      %s330 = smul.u32 2, %s24
      %p331 = scmp.lt.s32.totalorder %s330, 1
      %s332 = scalar_select %p331, %s330, 1
      %s333 = smul.addr %s332, 8
      %s334 = scalar_lea.vmem %s1, %s333
      %p335 = pneg %p81
      %p336 = pneg %p78
      %s337 = smul.u32 2, %s24
      %p338 = scmp.lt.s32.totalorder %s337, 1
      %s339 = scalar_select %p338, %s337, 1
      %s340 = smul.addr %s339, 8
      %s341 = scalar_lea.vmem %s2, %s340
      %p342 = pneg %p107
      %p343 = pneg %p104
      %p344 = pneg %p128
      %p345 = pneg %p125
      %p346 = pneg %p149
      %p347 = pneg %p146
      %p348 = pneg %p170
      %p349 = pneg %p167
      %p350 = pneg %p198
      %p351 = pneg %p195
      %s352 = smul.u32 4, %s25
      %s353 = smul.u32 2, %s24
      %p354 = scmp.lt.s32.totalorder %s352, 7
      %s355 = scalar_select %p354, %s352, 7
      %p356 = scmp.lt.s32.totalorder %s353, 1
      %s357 = scalar_select %p356, %s353, 1
      %s358 = smul.addr %s355, 2
      %s359 = sadd.s32 %s357, %s358
      %s360 = smul.addr %s359, 4
      %s361 = scalar_lea.vmem %s6, %s360
      %p362 = pneg %p224
      %p363 = pneg %p221
      %s364 = smul.u32 2, %s24
      %p365 = scmp.lt.s32.totalorder %s364, 1
      %s366 = scalar_select %p365, %s364, 1
      %s367 = smul.addr %s366, 8
      %s368 = scalar_lea.vmem %s7, %s367
      %p369 = pneg %p250
      %p370 = pneg %p247
      %s371 = smul.u32 2, %s24
      %p372 = scmp.lt.s32.totalorder %s371, 1
      %s373 = scalar_select %p372, %s371, 1
      %s374 = smul.addr %s373, 8
      %s375 = scalar_lea.vmem %s8, %s374
      %s376 = smul.u32 4, %s25
      %s377 = smul.u32 2, %s24
      %p378 = scmp.lt.s32.totalorder %s376, 7
      %s379 = scalar_select %p378, %s376, 7
      %p380 = scmp.lt.s32.totalorder %s377, 1
      %s381 = scalar_select %p380, %s377, 1
      %s382 = smul.addr %s379, 2
      %s383 = sadd.s32 %s381, %s382
      %s384 = smul.addr %s383, 4
      %s385 = scalar_lea.vmem %s0, %s384
      %s386 = smul.u32 4, %s25
      %s387 = smul.u32 2, %s24
      %s388 = smul.u32 2, %s24
      %p389 = scmp.lt.s32.totalorder %s388, 1
      %s390 = scalar_select %p389, %s388, 1
      %s391 = smul.addr %s390, 8
      %s392 = scalar_lea.vmem %s1, %s391
      %s393 = smul.u32 2, %s24
      %s394 = smul.u32 2, %s24
      %p395 = scmp.lt.s32.totalorder %s394, 1
      %s396 = scalar_select %p395, %s394, 1
      %s397 = smul.addr %s396, 8
      %s398 = scalar_lea.vmem %s2, %s397
      %s399 = smul.u32 2, %s24
      %s400 = smul.u32 4, %s25
      %s401 = smul.u32 2, %s24
      %p402 = scmp.lt.s32.totalorder %s400, 7
      %s403 = scalar_select %p402, %s400, 7
      %p404 = scmp.lt.s32.totalorder %s401, 1
      %s405 = scalar_select %p404, %s401, 1
      %s406 = smul.addr %s403, 2
      %s407 = sadd.s32 %s405, %s406
      %s408 = smul.addr %s407, 4
      %s409 = scalar_lea.vmem %s6, %s408
      %s410 = smul.u32 4, %s25
      %s411 = smul.u32 2, %s24
      %s412 = smul.u32 2, %s24
      %p413 = scmp.lt.s32.totalorder %s412, 1
      %s414 = scalar_select %p413, %s412, 1
      %s415 = smul.addr %s414, 8
      %s416 = scalar_lea.vmem %s7, %s415
      %s417 = smul.u32 2, %s24
      %s418 = smul.u32 2, %s24
      %p419 = scmp.lt.s32.totalorder %s418, 1
      %s420 = scalar_select %p419, %s418, 1
      %s421 = smul.addr %s420, 8
      %s422 = scalar_lea.vmem %s8, %s421
      %s423 = smul.u32 2, %s24
      %p425 = scmp.eq.s32.totalorder %s25, 0
      // Predicated region
      $region45: #{embedding_lstm_forward.1} parent=43 // pred_check
        %p426 = pneg %p425
      $region46: #{embedding_lstm_forward.1} parent=43 // pred_check_branch
        %428 = sbr.rel (%p426) target = $region48
      $region47: #{embedding_lstm_forward.1} parent=43 // pred_region
        %v429 = vld [vmem:[%s392] sm:$0xff]
        %v430 = vld [vmem:[%s392 + $0x8] sm:$0xff]
        %vm431 = vcmask 261120
        %432 = vst.msk [vmem:[%s416] sm:$0xff] %vm431, %v429
        %433 = vst.msk [vmem:[%s416 + $0x8] sm:$0xff] %vm431, %v430
        %v434 = vld [vmem:[%s398] sm:$0xff]
        %v435 = vld [vmem:[%s398 + $0x8] sm:$0xff]
        %436 = vst.msk [vmem:[%s422] sm:$0xff] %vm431, %v434
        %437 = vst.msk [vmem:[%s422 + $0x8] sm:$0xff] %vm431, %v435
      $region48: #{embedding_lstm_forward.1} parent=43 // pred_fallthru
        _
      %v438 = vld [vmem:[%s385] sm:$0xf]
      %v439 = vld [vmem:[%s385 + $0x4] sm:$0xf]
      %v440 = vld [vmem:[%s385 + $0x8] sm:$0xf]
      %v441 = vld [vmem:[%s385 + $0xc] sm:$0xf]
      %v442 = vld [vmem:[%s385 + $0x10] sm:$0xf]
      %v443 = vld [vmem:[%s385 + $0x14] sm:$0xf]
      %v444 = vld [vmem:[%s385 + $0x18] sm:$0xf]
      %v445 = vld [vmem:[%s385 + $0x1c] sm:$0xf]
      %v446 = vld [vmem:[%s3] sm:$0xf]
      %v447 = vld [vmem:[%s3 + $0x4] sm:$0xf]
      %v456 = vunpack.c.l.b16 %v438
      %v457 = vunpack.c.l.b16 %v439
      %v458 = vunpack.c.l.b16 %v440
      %v459 = vunpack.c.l.b16 %v441
      %v460 = vunpack.c.l.b16 %v442
      %v461 = vunpack.c.l.b16 %v443
      %v462 = vunpack.c.l.b16 %v444
      %v463 = vunpack.c.l.b16 %v445
      %v464 = vpack.c.b16 %v457, %v456
      %v465 = vpack.c.b16 %v459, %v458
      %v466 = vpack.c.b16 %v461, %v460
      %v467 = vpack.c.b16 %v463, %v462
      %v470 = vunpack.c.l.b16 %v446
      %v471 = vunpack.c.l.b16 %v447
      %v472 = vpack.c.b16 %v471, %v470
      %vm474 = vcmask 130048
      %v476 = vsel %vm474, %v464, 0
      %v479 = vsel %vm474, %v465, 0
      %v482 = vsel %vm474, %v466, 0
      %v485 = vsel %vm474, %v467, 0
      %487 = vmatprep.subr.bf16.mxu0 0
      %488 = vmatpush1.bf16.msra.mxu0 0
      %489 = vmatprep.subr.bf16.mxu0 0
      %490 = vmatpush1.bf16.msra.mxu0 0
      %491 = vmatprep.subr.bf16.mxu0 0
      %492 = vmatpush1.bf16.msra.mxu0 0
      %493 = vmatprep.subr.bf16.mxu0 0
      %494 = vmatpush1.bf16.msra.mxu0 0
      %495 = vmatprep.subr.bf16.mxu0 0
      %496 = vmatpush1.bf16.msra.mxu0 0
      %497 = vmatprep.subr.bf16.mxu0 0
      %498 = vmatpush1.bf16.msra.mxu0 0
      %499 = vmatprep.subr.bf16.mxu0 0
      %500 = vmatpush1.bf16.msra.mxu0 0
      %501 = vmatprep.subr.bf16.mxu0 0
      %502 = vmatpush1.bf16.msra.mxu0 %v472
      %503 = vmatprep.subr.bf16.mxu0 0
      %504 = vmatpush2.bf16.msra.mxu0 0
      %505 = vmatprep.subr.bf16.mxu0 0
      %506 = vmatpush2.bf16.msra.mxu0 0
      %507 = vmatprep.subr.bf16.mxu0 0
      %508 = vmatpush2.bf16.msra.mxu0 0
      %509 = vmatprep.subr.bf16.mxu0 0
      %510 = vmatpush2.bf16.msra.mxu0 0
      %511 = vmatprep.subr.bf16.mxu0 0
      %512 = vmatpush2.bf16.msra.mxu0 0
      %513 = vmatprep.subr.bf16.mxu0 0
      %514 = vmatpush2.bf16.msra.mxu0 0
      %515 = vmatprep.subr.bf16.mxu0 0
      %516 = vmatpush2.bf16.msra.mxu0 0
      %517 = vmatprep.subr.bf16.mxu0 0
      %518 = vmatpush2.bf16.msra.mxu0 0
      %519 = vmatprep.mubr.bf16.mxu0 0
      %520 = vmatmul.mubr.bf16.gmra.mxu0 %v476
      %v521 = vpop.f32.mrf.mxu0
      %v522 = vadd.f32 0.0, %v521
      %v523 = vpop.f32.mrf.mxu0
      %v524 = vpop.f32.mrf.mxu0
      %v525 = vadd.f32 0.0, %v524
      %v526 = vpop.f32.mrf.mxu0
      %527 = vmatprep.mubr.bf16.mxu0 0
      %528 = vmatmul.mubr.bf16.gmra.mxu0 %v479
      %v529 = vpop.f32.mrf.mxu0
      %v530 = vadd.f32 0.0, %v529
      %v531 = vpop.f32.mrf.mxu0
      %v532 = vpop.f32.mrf.mxu0
      %v533 = vadd.f32 0.0, %v532
      %v534 = vpop.f32.mrf.mxu0
      %535 = vmatprep.mubr.bf16.mxu0 0
      %536 = vmatmul.mubr.bf16.gmra.mxu0 %v482
      %v537 = vpop.f32.mrf.mxu0
      %v538 = vadd.f32 0.0, %v537
      %v539 = vpop.f32.mrf.mxu0
      %v540 = vpop.f32.mrf.mxu0
      %v541 = vadd.f32 0.0, %v540
      %v542 = vpop.f32.mrf.mxu0
      %543 = vmatprep.mubr.bf16.mxu0 0
      %544 = vmatmul.mubr.bf16.gmra.mxu0 %v485
      %v545 = vpop.f32.mrf.mxu0
      %v546 = vadd.f32 0.0, %v545
      %v547 = vpop.f32.mrf.mxu0
      %v548 = vpop.f32.mrf.mxu0
      %v549 = vadd.f32 0.0, %v548
      %v550 = vpop.f32.mrf.mxu0
      %551 = vdwg.mxu0
      %v552 = vld [vmem:[%s5] sm:$0x1]
      %v554 = vlaneseq
      %v555 = vshrl.u32 %v554, 7
      %v556 = vsub.s32 0, %v555
      %v557 = vrot.slane %v552, %v556
      %v559 = vadd.f32 %v522, %v557
      %v560 = vadd.f32 %v525, %v557
      %v561 = vadd.f32 %v530, %v557
      %v562 = vadd.f32 %v533, %v557
      %v563 = vadd.f32 %v538, %v557
      %v564 = vadd.f32 %v541, %v557
      %v565 = vadd.f32 %v546, %v557
      %v566 = vadd.f32 %v549, %v557
      %567 = vst [vmem:[#allocation2] sm:$0xff] %v559
      %568 = vst [vmem:[#allocation2 + $0x8] sm:$0xff] %v560
      %569 = vst [vmem:[#allocation2 + $0x10] sm:$0xff] %v561
      %570 = vst [vmem:[#allocation2 + $0x18] sm:$0xff] %v562
      %571 = vst [vmem:[#allocation2 + $0x20] sm:$0xff] %v563
      %572 = vst [vmem:[#allocation2 + $0x28] sm:$0xff] %v564
      %573 = vst [vmem:[#allocation2 + $0x30] sm:$0xff] %v565
      %574 = vst [vmem:[#allocation2 + $0x38] sm:$0xff] %v566
      %v575 = vld [vmem:[%s4] sm:$0xf]
      %v576 = vld [vmem:[%s4 + $0x4] sm:$0xf]
      %v577 = vld [vmem:[%s4 + $0x8] sm:$0xf]
      %v578 = vld [vmem:[%s4 + $0xc] sm:$0xf]
      %v579 = vld [vmem:[%s416] sm:$0xff]
      %v580 = vld [vmem:[%s416 + $0x8] sm:$0xff]
      %v581 = vpack.c.bf16 %v580, %v579
      %v582 = vld [vmem:[%s422] sm:$0xff]
      %v583 = vld [vmem:[%s422 + $0x8] sm:$0xff]
      %v584 = vld [vmem:[#allocation2] sm:$0xff]
      %v585 = vld [vmem:[#allocation2 + $0x8] sm:$0xff]
      %v590 = vunpack.c.l.b16 %v575
      %v591 = vunpack.c.l.b16 %v576
      %v592 = vunpack.c.l.b16 %v577
      %v593 = vunpack.c.l.b16 %v578
      %v594 = vpack.c.b16 %v591, %v590
      %v595 = vpack.c.b16 %v593, %v592
      %vm598 = vcmask 261120
      %v600 = vsel %vm598, %v581, 0
      %602 = vmatprep.subr.bf16.mxu0 0
      %603 = vmatpush1.bf16.msra.mxu0 0
      %604 = vmatprep.subr.bf16.mxu0 0
      %605 = vmatpush1.bf16.msra.mxu0 0
      %606 = vmatprep.subr.bf16.mxu0 0
      %607 = vmatpush1.bf16.msra.mxu0 0
      %608 = vmatprep.subr.bf16.mxu0 0
      %609 = vmatpush1.bf16.msra.mxu0 0
      %610 = vmatprep.subr.bf16.mxu0 0
      %611 = vmatpush1.bf16.msra.mxu0 0
      %612 = vmatprep.subr.bf16.mxu0 0
      %613 = vmatpush1.bf16.msra.mxu0 0
      %614 = vmatprep.subr.bf16.mxu0 0
      %615 = vmatpush1.bf16.msra.mxu0 %v595
      %616 = vmatprep.subr.bf16.mxu0 0
      %617 = vmatpush1.bf16.msra.mxu0 %v594
      %618 = vmatprep.subr.bf16.mxu0 0
      %619 = vmatpush2.bf16.msra.mxu0 0
      %620 = vmatprep.subr.bf16.mxu0 0
      %621 = vmatpush2.bf16.msra.mxu0 0
      %622 = vmatprep.subr.bf16.mxu0 0
      %623 = vmatpush2.bf16.msra.mxu0 0
      %624 = vmatprep.subr.bf16.mxu0 0
      %625 = vmatpush2.bf16.msra.mxu0 0
      %626 = vmatprep.subr.bf16.mxu0 0
      %627 = vmatpush2.bf16.msra.mxu0 0
      %628 = vmatprep.subr.bf16.mxu0 0
      %629 = vmatpush2.bf16.msra.mxu0 0
      %630 = vmatprep.subr.bf16.mxu0 0
      %631 = vmatpush2.bf16.msra.mxu0 0
      %632 = vmatprep.subr.bf16.mxu0 0
      %633 = vmatpush2.bf16.msra.mxu0 0
      %634 = vmatprep.mubr.bf16.mxu0 0
      %635 = vmatmul.mubr.bf16.gmra.mxu0 %v600
      %v636 = vpop.f32.mrf.mxu0
      %v637 = vadd.f32 0.0, %v636
      %v638 = vpop.f32.mrf.mxu0
      %v639 = vpop.f32.mrf.mxu0
      %v640 = vadd.f32 0.0, %v639
      %v641 = vpop.f32.mrf.mxu0
      %642 = vdwg.mxu0
      %v643 = vadd.f32 %v584, %v637
      %v644 = vadd.f32 %v585, %v640
      %v645 = vxor.u32 %v643, 2147483648
      %v646 = vxor.u32 %v644, 2147483648
      %v647 = vmul.f32 %v645, 1.442695
      %v648 = vpow.pop %v647
      %v649 = vmul.f32 %v646, 1.442695
      %v650 = vpow.pop %v649
      %v651 = vadd.f32 %v648, 1.0
      %v652 = vadd.f32 %v650, 1.0
      %v653 = vrcp.pop %v651
      %v654 = vmul.f32 1.0, %v653
      %v655 = vrcp.pop %v652
      %v656 = vmul.f32 1.0, %v655
      %v657 = vtanh.pop %v643
      %v658 = vtanh.pop %v644
      %661 = vrot.lane.b32.xlu0 %v582, 32
      %v662 = vpop.permute.xlu0 %661
      %663 = vrot.lane.b32.xlu0 %v583, 32
      %v664 = vpop.permute.xlu0 %663
      %v667 = vmul.f32 %v654, %v662
      %v668 = vmul.f32 %v656, %v664
      %671 = vrot.lane.b32.xlu0 %v657, 64
      %v672 = vpop.permute.xlu0 %671
      %673 = vrot.lane.b32.xlu0 %v658, 64
      %v674 = vpop.permute.xlu0 %673
      %v677 = vmul.f32 %v654, %v672
      %v678 = vmul.f32 %v656, %v674
      %681 = vrot.lane.b32.xlu0 %v677, 32
      %v682 = vpop.permute.xlu0 %681
      %683 = vrot.lane.b32.xlu0 %v678, 32
      %v684 = vpop.permute.xlu0 %683
      %v687 = vadd.f32 %v667, %v682
      %v688 = vadd.f32 %v668, %v684
      %v689 = vtanh.pop %v687
      %v690 = vtanh.pop %v688
      %693 = vrot.lane.b32.xlu0 %v689, 64
      %v694 = vpop.permute.xlu0 %693
      %695 = vrot.lane.b32.xlu0 %v690, 64
      %v696 = vpop.permute.xlu0 %695
      %v699 = vmul.f32 %v654, %v694
      %v700 = vmul.f32 %v656, %v696
      %v701 = vpack.c.bf16 %v700, %v699
      %v703 = vunpack.c.l.b16 %v701
      %v704 = vunpack.c.h.b16 %v701
      %v705 = vpack.c.b16 %v703, %v703
      %v706 = vpack.c.b16 %v704, %v704
      %707 = vrot.lane.b32.xlu0 %v705, 32
      %v708 = vpop.permute.xlu0 %707
      %709 = vrot.lane.b32.xlu0 %v706, 32
      %v710 = vpop.permute.xlu0 %709
      %vm713 = vcmask 257024
      %714 = vst.msk [vmem:[%s409] sm:$0xf] %vm713, %v708
      %715 = vst.msk [vmem:[%s409 + $0x4] sm:$0xf] %vm713, %v710
      %s716 = scalar_lea.vmem [#allocation2], 16
      %v717 = vld [vmem:[%s716] sm:$0xff]
      %v718 = vld [vmem:[%s716 + $0x8] sm:$0xff]
      %719 = vrot.lane.b32.xlu0 %v701, 32
      %v720 = vpop.permute.xlu0 %719
      %v722 = vsel %vm598, %v720, 0
      %724 = vmatprep.subr.bf16.mxu0 0
      %725 = vmatpush1.bf16.msra.mxu0 0
      %726 = vmatprep.subr.bf16.mxu0 0
      %727 = vmatpush1.bf16.msra.mxu0 0
      %728 = vmatprep.subr.bf16.mxu0 0
      %729 = vmatpush1.bf16.msra.mxu0 0
      %730 = vmatprep.subr.bf16.mxu0 0
      %731 = vmatpush1.bf16.msra.mxu0 0
      %732 = vmatprep.subr.bf16.mxu0 0
      %733 = vmatpush1.bf16.msra.mxu0 0
      %734 = vmatprep.subr.bf16.mxu0 0
      %735 = vmatpush1.bf16.msra.mxu0 0
      %736 = vmatprep.subr.bf16.mxu0 0
      %737 = vmatpush1.bf16.msra.mxu0 %v595
      %738 = vmatprep.subr.bf16.mxu0 0
      %739 = vmatpush1.bf16.msra.mxu0 %v594
      %740 = vmatprep.subr.bf16.mxu0 0
      %741 = vmatpush2.bf16.msra.mxu0 0
      %742 = vmatprep.subr.bf16.mxu0 0
      %743 = vmatpush2.bf16.msra.mxu0 0
      %744 = vmatprep.subr.bf16.mxu0 0
      %745 = vmatpush2.bf16.msra.mxu0 0
      %746 = vmatprep.subr.bf16.mxu0 0
      %747 = vmatpush2.bf16.msra.mxu0 0
      %748 = vmatprep.subr.bf16.mxu0 0
      %749 = vmatpush2.bf16.msra.mxu0 0
      %750 = vmatprep.subr.bf16.mxu0 0
      %751 = vmatpush2.bf16.msra.mxu0 0
      %752 = vmatprep.subr.bf16.mxu0 0
      %753 = vmatpush2.bf16.msra.mxu0 0
      %754 = vmatprep.subr.bf16.mxu0 0
      %755 = vmatpush2.bf16.msra.mxu0 0
      %756 = vmatprep.mubr.bf16.mxu0 0
      %757 = vmatmul.mubr.bf16.gmra.mxu0 %v722
      %v758 = vpop.f32.mrf.mxu0
      %v759 = vadd.f32 0.0, %v758
      %v760 = vpop.f32.mrf.mxu0
      %v761 = vpop.f32.mrf.mxu0
      %v762 = vadd.f32 0.0, %v761
      %v763 = vpop.f32.mrf.mxu0
      %764 = vdwg.mxu0
      %v765 = vadd.f32 %v717, %v759
      %v766 = vadd.f32 %v718, %v762
      %v767 = vxor.u32 %v765, 2147483648
      %v768 = vxor.u32 %v766, 2147483648
      %v769 = vmul.f32 %v767, 1.442695
      %v770 = vpow.pop %v769
      %v771 = vmul.f32 %v768, 1.442695
      %v772 = vpow.pop %v771
      %v773 = vadd.f32 %v770, 1.0
      %v774 = vadd.f32 %v772, 1.0
      %v775 = vrcp.pop %v773
      %v776 = vmul.f32 1.0, %v775
      %v777 = vrcp.pop %v774
      %v778 = vmul.f32 1.0, %v777
      %v779 = vtanh.pop %v765
      %v780 = vtanh.pop %v766
      %v781 = vmul.f32 %v776, %v687
      %v782 = vmul.f32 %v778, %v688
      %785 = vrot.lane.b32.xlu0 %v779, 64
      %v786 = vpop.permute.xlu0 %785
      %787 = vrot.lane.b32.xlu0 %v780, 64
      %v788 = vpop.permute.xlu0 %787
      %v791 = vmul.f32 %v776, %v786
      %v792 = vmul.f32 %v778, %v788
      %795 = vrot.lane.b32.xlu0 %v791, 32
      %v796 = vpop.permute.xlu0 %795
      %797 = vrot.lane.b32.xlu0 %v792, 32
      %v798 = vpop.permute.xlu0 %797
      %v801 = vadd.f32 %v781, %v796
      %v802 = vadd.f32 %v782, %v798
      %v803 = vtanh.pop %v801
      %v804 = vtanh.pop %v802
      %807 = vrot.lane.b32.xlu0 %v803, 64
      %v808 = vpop.permute.xlu0 %807
      %809 = vrot.lane.b32.xlu0 %v804, 64
      %v810 = vpop.permute.xlu0 %809
      %v813 = vmul.f32 %v776, %v808
      %v814 = vmul.f32 %v778, %v810
      %v815 = vpack.c.bf16 %v814, %v813
      %v817 = vunpack.c.l.b16 %v815
      %v818 = vunpack.c.h.b16 %v815
      %v819 = vpack.c.b16 %v817, %v817
      %v820 = vpack.c.b16 %v818, %v818
      %821 = vrot.lane.b32.xlu0 %v819, 32
      %v822 = vpop.permute.xlu0 %821
      %823 = vrot.lane.b32.xlu0 %v820, 32
      %v824 = vpop.permute.xlu0 %823
      %s827 = scalar_lea.vmem %s409, 8
      %828 = vst.msk [vmem:[%s827] sm:$0xf] %vm713, %v822
      %829 = vst.msk [vmem:[%s827 + $0x4] sm:$0xf] %vm713, %v824
      %s830 = scalar_lea.vmem [#allocation2], 32
      %v831 = vld [vmem:[%s830] sm:$0xff]
      %v832 = vld [vmem:[%s830 + $0x8] sm:$0xff]
      %833 = vrot.lane.b32.xlu0 %v815, 32
      %v834 = vpop.permute.xlu0 %833
      %v836 = vsel %vm598, %v834, 0
      %838 = vmatprep.subr.bf16.mxu0 0
      %839 = vmatpush1.bf16.msra.mxu0 0
      %840 = vmatprep.subr.bf16.mxu0 0
      %841 = vmatpush1.bf16.msra.mxu0 0
      %842 = vmatprep.subr.bf16.mxu0 0
      %843 = vmatpush1.bf16.msra.mxu0 0
      %844 = vmatprep.subr.bf16.mxu0 0
      %845 = vmatpush1.bf16.msra.mxu0 0
      %846 = vmatprep.subr.bf16.mxu0 0
      %847 = vmatpush1.bf16.msra.mxu0 0
      %848 = vmatprep.subr.bf16.mxu0 0
      %849 = vmatpush1.bf16.msra.mxu0 0
      %850 = vmatprep.subr.bf16.mxu0 0
      %851 = vmatpush1.bf16.msra.mxu0 %v595
      %852 = vmatprep.subr.bf16.mxu0 0
      %853 = vmatpush1.bf16.msra.mxu0 %v594
      %854 = vmatprep.subr.bf16.mxu0 0
      %855 = vmatpush2.bf16.msra.mxu0 0
      %856 = vmatprep.subr.bf16.mxu0 0
      %857 = vmatpush2.bf16.msra.mxu0 0
      %858 = vmatprep.subr.bf16.mxu0 0
      %859 = vmatpush2.bf16.msra.mxu0 0
      %860 = vmatprep.subr.bf16.mxu0 0
      %861 = vmatpush2.bf16.msra.mxu0 0
      %862 = vmatprep.subr.bf16.mxu0 0
      %863 = vmatpush2.bf16.msra.mxu0 0
      %864 = vmatprep.subr.bf16.mxu0 0
      %865 = vmatpush2.bf16.msra.mxu0 0
      %866 = vmatprep.subr.bf16.mxu0 0
      %867 = vmatpush2.bf16.msra.mxu0 0
      %868 = vmatprep.subr.bf16.mxu0 0
      %869 = vmatpush2.bf16.msra.mxu0 0
      %870 = vmatprep.mubr.bf16.mxu0 0
      %871 = vmatmul.mubr.bf16.gmra.mxu0 %v836
      %v872 = vpop.f32.mrf.mxu0
      %v873 = vadd.f32 0.0, %v872
      %v874 = vpop.f32.mrf.mxu0
      %v875 = vpop.f32.mrf.mxu0
      %v876 = vadd.f32 0.0, %v875
      %v877 = vpop.f32.mrf.mxu0
      %878 = vdwg.mxu0
      %v879 = vadd.f32 %v831, %v873
      %v880 = vadd.f32 %v832, %v876
      %v881 = vxor.u32 %v879, 2147483648
      %v882 = vxor.u32 %v880, 2147483648
      %v883 = vmul.f32 %v881, 1.442695
      %v884 = vpow.pop %v883
      %v885 = vmul.f32 %v882, 1.442695
      %v886 = vpow.pop %v885
      %v887 = vadd.f32 %v884, 1.0
      %v888 = vadd.f32 %v886, 1.0
      %v889 = vrcp.pop %v887
      %v890 = vmul.f32 1.0, %v889
      %v891 = vrcp.pop %v888
      %v892 = vmul.f32 1.0, %v891
      %v893 = vtanh.pop %v879
      %v894 = vtanh.pop %v880
      %v895 = vmul.f32 %v890, %v801
      %v896 = vmul.f32 %v892, %v802
      %899 = vrot.lane.b32.xlu0 %v893, 64
      %v900 = vpop.permute.xlu0 %899
      %901 = vrot.lane.b32.xlu0 %v894, 64
      %v902 = vpop.permute.xlu0 %901
      %v905 = vmul.f32 %v890, %v900
      %v906 = vmul.f32 %v892, %v902
      %909 = vrot.lane.b32.xlu0 %v905, 32
      %v910 = vpop.permute.xlu0 %909
      %911 = vrot.lane.b32.xlu0 %v906, 32
      %v912 = vpop.permute.xlu0 %911
      %v915 = vadd.f32 %v895, %v910
      %v916 = vadd.f32 %v896, %v912
      %v917 = vtanh.pop %v915
      %v918 = vtanh.pop %v916
      %921 = vrot.lane.b32.xlu0 %v917, 64
      %v922 = vpop.permute.xlu0 %921
      %923 = vrot.lane.b32.xlu0 %v918, 64
      %v924 = vpop.permute.xlu0 %923
      %v927 = vmul.f32 %v890, %v922
      %v928 = vmul.f32 %v892, %v924
      %v929 = vpack.c.bf16 %v928, %v927
      %v931 = vunpack.c.l.b16 %v929
      %v932 = vunpack.c.h.b16 %v929
      %v933 = vpack.c.b16 %v931, %v931
      %v934 = vpack.c.b16 %v932, %v932
      %935 = vrot.lane.b32.xlu0 %v933, 32
      %v936 = vpop.permute.xlu0 %935
      %937 = vrot.lane.b32.xlu0 %v934, 32
      %v938 = vpop.permute.xlu0 %937
      %s941 = scalar_lea.vmem %s409, 16
      %942 = vst.msk [vmem:[%s941] sm:$0xf] %vm713, %v936
      %943 = vst.msk [vmem:[%s941 + $0x4] sm:$0xf] %vm713, %v938
      %s944 = scalar_lea.vmem [#allocation2], 48
      %v945 = vld [vmem:[%s944] sm:$0xff]
      %v946 = vld [vmem:[%s944 + $0x8] sm:$0xff]
      %947 = vrot.lane.b32.xlu0 %v929, 32
      %v948 = vpop.permute.xlu0 %947
      %v950 = vsel %vm598, %v948, 0
      %952 = vmatprep.subr.bf16.mxu0 0
      %953 = vmatpush1.bf16.msra.mxu0 0
      %954 = vmatprep.subr.bf16.mxu0 0
      %955 = vmatpush1.bf16.msra.mxu0 0
      %956 = vmatprep.subr.bf16.mxu0 0
      %957 = vmatpush1.bf16.msra.mxu0 0
      %958 = vmatprep.subr.bf16.mxu0 0
      %959 = vmatpush1.bf16.msra.mxu0 0
      %960 = vmatprep.subr.bf16.mxu0 0
      %961 = vmatpush1.bf16.msra.mxu0 0
      %962 = vmatprep.subr.bf16.mxu0 0
      %963 = vmatpush1.bf16.msra.mxu0 0
      %964 = vmatprep.subr.bf16.mxu0 0
      %965 = vmatpush1.bf16.msra.mxu0 %v595
      %966 = vmatprep.subr.bf16.mxu0 0
      %967 = vmatpush1.bf16.msra.mxu0 %v594
      %968 = vmatprep.subr.bf16.mxu0 0
      %969 = vmatpush2.bf16.msra.mxu0 0
      %970 = vmatprep.subr.bf16.mxu0 0
      %971 = vmatpush2.bf16.msra.mxu0 0
      %972 = vmatprep.subr.bf16.mxu0 0
      %973 = vmatpush2.bf16.msra.mxu0 0
      %974 = vmatprep.subr.bf16.mxu0 0
      %975 = vmatpush2.bf16.msra.mxu0 0
      %976 = vmatprep.subr.bf16.mxu0 0
      %977 = vmatpush2.bf16.msra.mxu0 0
      %978 = vmatprep.subr.bf16.mxu0 0
      %979 = vmatpush2.bf16.msra.mxu0 0
      %980 = vmatprep.subr.bf16.mxu0 0
      %981 = vmatpush2.bf16.msra.mxu0 0
      %982 = vmatprep.subr.bf16.mxu0 0
      %983 = vmatpush2.bf16.msra.mxu0 0
      %984 = vmatprep.mubr.bf16.mxu0 0
      %985 = vmatmul.mubr.bf16.gmra.mxu0 %v950
      %v986 = vpop.f32.mrf.mxu0
      %v987 = vadd.f32 0.0, %v986
      %v988 = vpop.f32.mrf.mxu0
      %v989 = vpop.f32.mrf.mxu0
      %v990 = vadd.f32 0.0, %v989
      %v991 = vpop.f32.mrf.mxu0
      %992 = vdwg.mxu0
      %v993 = vadd.f32 %v945, %v987
      %v994 = vadd.f32 %v946, %v990
      %v995 = vxor.u32 %v993, 2147483648
      %v996 = vxor.u32 %v994, 2147483648
      %v997 = vmul.f32 %v995, 1.442695
      %v998 = vpow.pop %v997
      %v999 = vmul.f32 %v996, 1.442695
      %v1000 = vpow.pop %v999
      %v1001 = vadd.f32 %v998, 1.0
      %v1002 = vadd.f32 %v1000, 1.0
      %v1003 = vrcp.pop %v1001
      %v1004 = vmul.f32 1.0, %v1003
      %v1005 = vrcp.pop %v1002
      %v1006 = vmul.f32 1.0, %v1005
      %v1007 = vtanh.pop %v993
      %v1008 = vtanh.pop %v994
      %v1009 = vmul.f32 %v1004, %v915
      %v1010 = vmul.f32 %v1006, %v916
      %1013 = vrot.lane.b32.xlu0 %v1007, 64
      %v1014 = vpop.permute.xlu0 %1013
      %1015 = vrot.lane.b32.xlu0 %v1008, 64
      %v1016 = vpop.permute.xlu0 %1015
      %v1019 = vmul.f32 %v1004, %v1014
      %v1020 = vmul.f32 %v1006, %v1016
      %1023 = vrot.lane.b32.xlu0 %v1019, 32
      %v1024 = vpop.permute.xlu0 %1023
      %1025 = vrot.lane.b32.xlu0 %v1020, 32
      %v1026 = vpop.permute.xlu0 %1025
      %v1029 = vadd.f32 %v1009, %v1024
      %v1030 = vadd.f32 %v1010, %v1026
      %v1031 = vtanh.pop %v1029
      %v1032 = vtanh.pop %v1030
      %1035 = vrot.lane.b32.xlu0 %v1031, 64
      %v1036 = vpop.permute.xlu0 %1035
      %1037 = vrot.lane.b32.xlu0 %v1032, 64
      %v1038 = vpop.permute.xlu0 %1037
      %v1041 = vmul.f32 %v1004, %v1036
      %v1042 = vmul.f32 %v1006, %v1038
      %v1043 = vpack.c.bf16 %v1042, %v1041
      %v1045 = vunpack.c.l.b16 %v1043
      %v1046 = vunpack.c.h.b16 %v1043
      %v1047 = vpack.c.b16 %v1045, %v1045
      %v1048 = vpack.c.b16 %v1046, %v1046
      %1049 = vrot.lane.b32.xlu0 %v1047, 32
      %v1050 = vpop.permute.xlu0 %1049
      %1051 = vrot.lane.b32.xlu0 %v1048, 32
      %v1052 = vpop.permute.xlu0 %1051
      %s1055 = scalar_lea.vmem %s409, 24
      %1056 = vst.msk [vmem:[%s1055] sm:$0xf] %vm713, %v1050
      %1057 = vst.msk [vmem:[%s1055 + $0x4] sm:$0xf] %vm713, %v1052
      %v1058 = vunpack.c.l.bf16 %v1043
      %v1059 = vunpack.c.h.bf16 %v1043
      %1062 = vrot.lane.b32.xlu0 %v1058, 32
      %v1063 = vpop.permute.xlu0 %1062
      %1064 = vrot.lane.b32.xlu0 %v1059, 32
      %v1065 = vpop.permute.xlu0 %1064
      %1068 = vst.msk [vmem:[%s416] sm:$0xff] %vm598, %v1063
      %1069 = vst.msk [vmem:[%s416 + $0x8] sm:$0xff] %vm598, %v1065
      %1072 = vrot.lane.b32.xlu0 %v1029, 96
      %v1073 = vpop.permute.xlu0 %1072
      %1074 = vrot.lane.b32.xlu0 %v1030, 96
      %v1075 = vpop.permute.xlu0 %1074
      %1078 = vst.msk [vmem:[%s422] sm:$0xff] %vm598, %v1073
      %1079 = vst.msk [vmem:[%s422 + $0x8] sm:$0xff] %vm598, %v1075
      %s1080 = smul.u32 4, %s25
      %s1081 = smul.u32 2, %s24
      %p1082 = scmp.lt.s32.totalorder %s1080, 7
      %s1083 = scalar_select %p1082, %s1080, 7
      %p1084 = scmp.lt.s32.totalorder %s1081, 1
      %s1085 = scalar_select %p1084, %s1081, 1
      %s1086 = smul.addr %s1083, 2
      %s1087 = sadd.s32 %s1085, %s1086
      %s1088 = smul.addr %s1087, 4
      %s1089 = scalar_lea.vmem %s6, %s1088
      %s1090 = smul.u32 2, %s24
      %p1091 = scmp.lt.s32.totalorder %s1090, 1
      %s1092 = scalar_select %p1091, %s1090, 1
      %s1093 = smul.addr %s1092, 8
      %s1094 = scalar_lea.vmem %s7, %s1093
      %s1095 = smul.u32 2, %s24
      %p1096 = scmp.lt.s32.totalorder %s1095, 1
      %s1097 = scalar_select %p1096, %s1095, 1
      %s1098 = smul.addr %s1097, 8
      %s1099 = scalar_lea.vmem %s8, %s1098
      // Predicated region
      $region49: #{embedding_lstm_forward.1} parent=43 // pred_check
        %p1100 = pneg %p195
      $region50: #{embedding_lstm_forward.1} parent=43 // pred_check_branch
        %1102 = sbr.rel (%p1100) target = $region52
      $region51: #{embedding_lstm_forward.1} parent=43 // pred_region
        %s1103 = smul.u32 4, %s25
        %s1104 = smul.u32 2, %s24
      $region52: #{embedding_lstm_forward.1} parent=43 // pred_fallthru
        _
      // Predicated region
      $region53: #{embedding_lstm_forward.1} parent=43 // pred_check
        %p1105 = pneg %p221
      $region54: #{embedding_lstm_forward.1} parent=43 // pred_check_branch
        %1107 = sbr.rel (%p1105) target = $region56
      $region55: #{embedding_lstm_forward.1} parent=43 // pred_region
        %s1108 = smul.u32 2, %s24
      $region56: #{embedding_lstm_forward.1} parent=43 // pred_fallthru
        _
      // Predicated region
      $region57: #{embedding_lstm_forward.1} parent=43 // pred_check
        %p1109 = pneg %p247
      $region58: #{embedding_lstm_forward.1} parent=43 // pred_check_branch
        %1111 = sbr.rel (%p1109) target = $region60
      $region59: #{embedding_lstm_forward.1} parent=43 // pred_region
        %s1112 = smul.u32 2, %s24
      $region60: #{embedding_lstm_forward.1} parent=43 // pred_fallthru
        _
      // Predicated region
      $region61: #{embedding_lstm_forward.1} parent=43 // pred_check
        %p1113 = pneg %p221
      $region62: #{embedding_lstm_forward.1} parent=43 // pred_check_branch
        %1115 = sbr.rel (%p1113) target = $region64
      $region63: #{embedding_lstm_forward.1} parent=43 // pred_region
        %s1116 = smul.u32 2, %s24
        %p1117 = scmp.lt.s32.totalorder %s1116, 1
        %s1118 = scalar_select %p1117, %s1116, 1
        %s1119 = smul.addr %s1118, 8
        %s1120 = scalar_lea.vmem %s7, %s1119
      $region64: #{embedding_lstm_forward.1} parent=43 // pred_fallthru
        _
      // Predicated region
      $region65: #{embedding_lstm_forward.1} parent=43 // pred_check
        %p1121 = pneg %p247
      $region66: #{embedding_lstm_forward.1} parent=43 // pred_check_branch
        %1123 = sbr.rel (%p1121) target = $region68
      $region67: #{embedding_lstm_forward.1} parent=43 // pred_region
        %s1124 = smul.u32 2, %s24
        %p1125 = scmp.lt.s32.totalorder %s1124, 1
        %s1126 = scalar_select %p1125, %s1124, 1
        %s1127 = smul.addr %s1126, 8
        %s1128 = scalar_lea.vmem %s8, %s1127
      $region68: #{embedding_lstm_forward.1} parent=43 // pred_fallthru
        _
    $region44: #{embedding_lstm_forward.1} parent=5 // pred_fallthru
      _
    %p1129 = scmp.le.s32.totalorder 2, %s15
    // Predicated region
    $region69: #{embedding_lstm_forward.1} parent=5 // pred_check
      %p1130 = pneg %p1129
    $region70: #{embedding_lstm_forward.1} parent=5 // pred_check_branch
      %1132 = sbr.rel (%p1130) target = $region72
    $region71: #{embedding_lstm_forward.1} parent=5 // pred_region
      %s1133 = ssub.s32 %s15, 2
      // Predicated region
      $region73: #{embedding_lstm_forward.1} parent=71 // pred_check
        %p1134 = pneg %p201
      $region74: #{embedding_lstm_forward.1} parent=71 // pred_check_branch
        %1136 = sbr.rel (%p1134) target = $region76
      $region75: #{embedding_lstm_forward.1} parent=71 // pred_region
        %s1137 = smul.u32 4, %s27
        %s1138 = smul.u32 2, %s26
        %p1139 = scmp.lt.s32.totalorder %s1137, 7
        %s1140 = scalar_select %p1139, %s1137, 7
        %p1141 = scmp.lt.s32.totalorder %s1138, 1
        %s1142 = scalar_select %p1141, %s1138, 1
        %s1143 = smul.addr %s1140, 2
        %s1144 = sadd.s32 %s1142, %s1143
        %s1145 = smul.addr %s1144, 4
        %s1146 = scalar_lea.vmem %s6, %s1145
      $region76: #{embedding_lstm_forward.1} parent=71 // pred_fallthru
        _
    $region72: #{embedding_lstm_forward.1} parent=5 // pred_fallthru
      _
  $region6: #{embedding_lstm_forward.1} parent=0 // loop_footer
    %s19 = sadd.s32 1, %s15
  $region7: #{embedding_lstm_forward.1} parent=0 // loop_footer_branch
    %14 = sbr.rel target = $region3
  $region8: #{embedding_lstm_forward.1} parent=0 // loop_exit
    _

</llo_original>
